<compile_context>
chip_gen: v7x
topology: tpu7x:2x2x1
jax: 0.10.0
libtpu: 0.0.40
codegen_flags: <defaults>
</compile_context>

<pallas_src>
import functools

import jax
import jax.numpy as jnp
from jax.experimental import pallas as pl
from jax.experimental.pallas import tpu as pltpu


def _layernorm_f32(x, w, b, eps):
    mu = jnp.mean(x, axis=-1, keepdims=True)
    var = jnp.mean((x - mu) ** 2, axis=-1, keepdims=True)
    return (x - mu) * jax.lax.rsqrt(var + eps) * w + b


def _layer_kernel(xq_ref, xkv_ref,
                  ln1_w, ln1_b,
                  wq, wkv, wp, bp,
                  ln2_w, ln2_b,
                  w1, b1, w2, b2,
                  o_ref,
                  *, num_heads, head_dim, scale, eps, compute_dtype):
    """One (batch, query-tile) grid step of the full pre-norm transformer layer.

    xq_ref : (tq, C)  query rows for this tile (batch dim squeezed)
    xkv_ref: (N,  C)  full sequence of the same batch element (for K/V)
    Weights are pre-transposed to (in, out) and stored in `compute_dtype`.
    """
    C = num_heads * head_dim
    cd = compute_dtype

    xq = xq_ref[...].astype(jnp.float32)          # (tq, C)
    xkv = xkv_ref[...].astype(jnp.float32)        # (N,  C)

    ln1w = ln1_w[...].astype(jnp.float32)
    ln1b = ln1_b[...].astype(jnp.float32)

    # ---- LayerNorm 1 (f32 statistics) ----
    xn_q = _layernorm_f32(xq, ln1w, ln1b, eps)    # (tq, C)
    xn_kv = _layernorm_f32(xkv, ln1w, ln1b, eps)  # (N,  C)

    # ---- Q / KV projections (bf16 inputs, f32 accumulation, no bias) ----
    q = jnp.dot(xn_q.astype(cd), wq[...], preferred_element_type=jnp.float32)    # (tq, C)
    kv = jnp.dot(xn_kv.astype(cd), wkv[...], preferred_element_type=jnp.float32)  # (N, 2C)
    k = kv[:, :C]                                                                  # (N, C)
    v = kv[:, C:]                                                                  # (N, C)

    tq = xq.shape[0]
    m = xkv.shape[0]

    # Batched-head attention: single contraction over all heads.
    qh = q.reshape(tq, num_heads, head_dim).transpose(1, 0, 2)   # (H, tq, D)
    kh = k.reshape(m, num_heads, head_dim).transpose(1, 0, 2)    # (H, m,  D)
    vh = v.reshape(m, num_heads, head_dim).transpose(1, 0, 2)    # (H, m,  D)

    s = jnp.einsum('hnd,hmd->hnm', qh.astype(cd), kh.astype(cd),
                   preferred_element_type=jnp.float32) * scale    # (H, tq, m)

    # Numerically stable softmax over keys (f32).
    s = s - jnp.max(s, axis=-1, keepdims=True)
    p = jnp.exp(s)
    p = p * pl.reciprocal(jnp.sum(p, axis=-1, keepdims=True), approx=True)

    att = jnp.einsum('hnm,hmd->hnd', p.astype(cd), vh.astype(cd),
                     preferred_element_type=jnp.float32)          # (H, tq, D)
    att = att.transpose(1, 0, 2).reshape(tq, C)                   # (tq, C)

    # ---- output projection (bias) + residual 1 ----
    proj = jnp.dot(att.astype(cd), wp[...], preferred_element_type=jnp.float32)
    proj = proj + bp[...].astype(jnp.float32)
    x1 = xq + proj                                                # (tq, C)

    # ---- LayerNorm 2 ----
    xn2 = _layernorm_f32(x1, ln2_w[...].astype(jnp.float32),
                         ln2_b[...].astype(jnp.float32), eps)

    # ---- MLP: fc1 -> relu -> fc2 ----
    h1 = jnp.dot(xn2.astype(cd), w1[...], preferred_element_type=jnp.float32)
    h1 = jnp.maximum(h1 + b1[...].astype(jnp.float32), 0.0)       # (tq, 4C)
    h2 = jnp.dot(h1.astype(cd), w2[...], preferred_element_type=jnp.float32)
    h2 = h2 + b2[...].astype(jnp.float32)

    o_ref[...] = (x1 + h2).astype(o_ref.dtype)                    # residual 2


def _pick_tq(n):
    """Query-tile size: full sequence if small, else a 256/128-row tile."""
    if n <= 256:
        return n
    for t in (256, 128):
        if n % t == 0:
            return t
    return n  # fallback: single tile


def _vmem_limit_bytes(n, tq, c, h_dim, num_heads, w_itemsize):
    weights = w_itemsize * (2 * c * c + 2 * c * c + 2 * c * h_dim)       # wq,wkv,wp,w1,w2
    vectors = 4 * (7 * c + h_dim)                                        # ln / bias vecs
    acts = 4 * (6 * tq * c + 3 * n * c + 2 * n * c
                + 2 * num_heads * tq * n + 2 * tq * h_dim)               # f32 intermediates
    est = 2 * (weights + vectors + acts)                                 # double-buffer + slack
    return int(min(max(est, 16 * 1024 * 1024), 64 * 1024 * 1024))


def transformer_layer(x, params, *, num_heads, compute_dtype=jnp.bfloat16):
    """x: (B, N, C) float32; params: PyTorch-layout weights (see init_params)."""
    B, N, C = x.shape
    assert C % num_heads == 0
    head_dim = C // num_heads
    scale = head_dim ** (-0.5)
    h_dim = params["w1"].shape[0]

    tq = _pick_tq(N)
    assert N % tq == 0
    n_q_tiles = N // tq

    # One-time layout plumbing in the wrapper: PyTorch (out, in) -> (in, out), bf16.
    def prep_w(w):
        return jnp.asarray(w, jnp.float32).T.astype(compute_dtype)

    f32 = lambda a: jnp.asarray(a, jnp.float32)
    param_list = [
        f32(params["ln1_w"]), f32(params["ln1_b"]),
        prep_w(params["wq"]), prep_w(params["wkv"]), prep_w(params["wp"]), f32(params["bp"]),
        f32(params["ln2_w"]), f32(params["ln2_b"]),
        prep_w(params["w1"]), f32(params["b1"]), prep_w(params["w2"]), f32(params["b2"]),
    ]

    kernel = functools.partial(
        _layer_kernel,
        num_heads=num_heads, head_dim=head_dim, scale=scale, eps=1e-5,
        compute_dtype=compute_dtype)

    in_specs = [
        # Query tile of x (leading batch dim squeezed -> lane-dense (tq, C) slab).
        pl.BlockSpec((None, tq, C), lambda b, qi: (b, qi, 0)),
        # Full sequence of the same batch element, used for K/V.
        pl.BlockSpec((None, N, C), lambda b, qi: (b, 0, 0)),
    ]
    for p in param_list:
        in_specs.append(
            pl.BlockSpec(p.shape, lambda b, qi, _nd=p.ndim: (0,) * _nd))

    out_spec = pl.BlockSpec((None, tq, C), lambda b, qi: (b, qi, 0))

    return pl.pallas_call(
        kernel,
        out_shape=jax.ShapeDtypeStruct((B, N, C), jnp.float32),
        grid_spec=pltpu.PrefetchScalarGridSpec(
            num_scalar_prefetch=0,
            grid=(B, n_q_tiles),              # two parallel axes -> megacore-friendly
            in_specs=in_specs,
            out_specs=out_spec,
        ),
        compiler_params=pltpu.CompilerParams(
            dimension_semantics=("parallel", "parallel"),
            vmem_limit_bytes=_vmem_limit_bytes(
                N, tq, C, h_dim, num_heads,
                jnp.dtype(compute_dtype).itemsize),
        ),
    )(x, x, *param_list)


def init_params(key, dim_self, mlp_ratio=4.0):
    """Deterministic synthetic parameters matching TransformerLayer shapes.
    Linear weights use PyTorch (out_features, in_features) layout; bias=False on
    to_queries / to_keys_values (TransformerLayer default), bias=True on
    project / MLP. The wrapper transposes+casts them once before the kernel."""
    h_dim = int(dim_self * mlp_ratio)
    ks = jax.random.split(key, 8)
    std = 0.02
    return {
        # LayerNorm 1 / 2 (affine), shaped (1, C) for 2D VMEM layout.
        "ln1_w": jnp.ones((1, dim_self), jnp.float32),
        "ln1_b": jnp.zeros((1, dim_self), jnp.float32),
        "ln2_w": jnp.ones((1, dim_self), jnp.float32),
        "ln2_b": jnp.zeros((1, dim_self), jnp.float32),
        # Attention (PyTorch layout: (out, in)).
        "wq":  std * jax.random.normal(ks[0], (dim_self, dim_self), jnp.float32),
        "wkv": std * jax.random.normal(ks[1], (2 * dim_self, dim_self), jnp.float32),
        "wp":  std * jax.random.normal(ks[2], (dim_self, dim_self), jnp.float32),
        "bp":  std * jax.random.normal(ks[3], (1, dim_self), jnp.float32),
        # MLP.
        "w1": std * jax.random.normal(ks[4], (h_dim, dim_self), jnp.float32),
        "b1": std * jax.random.normal(ks[5], (1, h_dim), jnp.float32),
        "w2": std * jax.random.normal(ks[6], (dim_self, h_dim), jnp.float32),
        "b2": std * jax.random.normal(ks[7], (1, dim_self), jnp.float32),
    }


if __name__ == "__main__":
    B, N, C = 2, 8, 32          # batch, seq, dim_self
    NUM_HEADS = 4               # head_dim = 8

    key = jax.random.PRNGKey(0)
    kx, kp = jax.random.split(key)
    x = jax.random.normal(kx, (B, N, C), dtype=jnp.float32)
    params = init_params(kp, C, mlp_ratio=4.0)

    out = transformer_layer(x, params, num_heads=NUM_HEADS)
    jax.block_until_ready(out)
    assert out.shape == (B, N, C)
    assert bool(jnp.all(jnp.isfinite(out)))
    print("KERNEL_OK")
</pallas_src>

<mosaic_0001>
module attributes {stable_mosaic.version = 11 : i64} {
  func.func @_layer_kernel(%arg0: i32, %arg1: i32, %arg2: memref<1x8x32xf32, #tpu.memory_space<vmem>>, %arg3: memref<1x8x32xf32, #tpu.memory_space<vmem>>, %arg4: memref<1x32xf32, #tpu.memory_space<vmem>>, %arg5: memref<1x32xf32, #tpu.memory_space<vmem>>, %arg6: memref<32x32xbf16, #tpu.memory_space<vmem>>, %arg7: memref<32x64xbf16, #tpu.memory_space<vmem>>, %arg8: memref<32x32xbf16, #tpu.memory_space<vmem>>, %arg9: memref<1x32xf32, #tpu.memory_space<vmem>>, %arg10: memref<1x32xf32, #tpu.memory_space<vmem>>, %arg11: memref<1x32xf32, #tpu.memory_space<vmem>>, %arg12: memref<32x128xbf16, #tpu.memory_space<vmem>>, %arg13: memref<1x128xf32, #tpu.memory_space<vmem>>, %arg14: memref<128x32xbf16, #tpu.memory_space<vmem>>, %arg15: memref<1x32xf32, #tpu.memory_space<vmem>>, %arg16: memref<1x8x32xf32, #tpu.memory_space<vmem>>) attributes {dimension_semantics = [#tpu.dimension_semantics<parallel>, #tpu.dimension_semantics<parallel>], iteration_bounds = array<i64: 2, 1>, scalar_prefetch = 0 : i64, scratch_operands = 0 : i64, tpu.core_type = #tpu.core_type<tc>, window_params = [{transform_indices = @transform_0, window_bounds = array<i64: 1, 8, 32>}, {transform_indices = @transform_1, window_bounds = array<i64: 1, 8, 32>}, {pipeline_mode = #tpu.pipeline_mode<synchronous>, transform_indices = @transform_2, window_bounds = array<i64: 1, 32>}, {pipeline_mode = #tpu.pipeline_mode<synchronous>, transform_indices = @transform_3, window_bounds = array<i64: 1, 32>}, {pipeline_mode = #tpu.pipeline_mode<synchronous>, transform_indices = @transform_4, window_bounds = array<i64: 32, 32>}, {pipeline_mode = #tpu.pipeline_mode<synchronous>, transform_indices = @transform_5, window_bounds = array<i64: 32, 64>}, {pipeline_mode = #tpu.pipeline_mode<synchronous>, transform_indices = @transform_6, window_bounds = array<i64: 32, 32>}, {pipeline_mode = #tpu.pipeline_mode<synchronous>, transform_indices = @transform_7, window_bounds = array<i64: 1, 32>}, {pipeline_mode = #tpu.pipeline_mode<synchronous>, transform_indices = @transform_8, window_bounds = array<i64: 1, 32>}, {pipeline_mode = #tpu.pipeline_mode<synchronous>, transform_indices = @transform_9, window_bounds = array<i64: 1, 32>}, {pipeline_mode = #tpu.pipeline_mode<synchronous>, transform_indices = @transform_10, window_bounds = array<i64: 32, 128>}, {pipeline_mode = #tpu.pipeline_mode<synchronous>, transform_indices = @transform_11, window_bounds = array<i64: 1, 128>}, {pipeline_mode = #tpu.pipeline_mode<synchronous>, transform_indices = @transform_12, window_bounds = array<i64: 128, 32>}, {pipeline_mode = #tpu.pipeline_mode<synchronous>, transform_indices = @transform_13, window_bounds = array<i64: 1, 32>}, {transform_indices = @transform_14, window_bounds = array<i64: 1, 8, 32>}]} {
    %c0 = arith.constant 0 : index
    %c0_0 = arith.constant 0 : index
    %c0_1 = arith.constant 0 : index
    %0 = vector.load %arg2[%c0, %c0_0, %c0_1] : memref<1x8x32xf32, #tpu.memory_space<vmem>>, vector<1x8x32xf32>
    %1 = vector.shape_cast %0 : vector<1x8x32xf32> to vector<8x32xf32>
    %c0_2 = arith.constant 0 : index
    %c0_3 = arith.constant 0 : index
    %c0_4 = arith.constant 0 : index
    %2 = vector.load %arg3[%c0_2, %c0_3, %c0_4] : memref<1x8x32xf32, #tpu.memory_space<vmem>>, vector<1x8x32xf32>
    %3 = vector.shape_cast %2 : vector<1x8x32xf32> to vector<8x32xf32>
    %c0_5 = arith.constant 0 : index
    %c0_6 = arith.constant 0 : index
    %4 = vector.load %arg4[%c0_5, %c0_6] : memref<1x32xf32, #tpu.memory_space<vmem>>, vector<1x32xf32>
    %c0_7 = arith.constant 0 : index
    %c0_8 = arith.constant 0 : index
    %5 = vector.load %arg5[%c0_7, %c0_8] : memref<1x32xf32, #tpu.memory_space<vmem>>, vector<1x32xf32>
    %cst = arith.constant dense<0.000000e+00> : vector<8xf32>
    %6 = vector.multi_reduction <add>, %1, %cst [1] : vector<8x32xf32> to vector<8xf32>
    %7 = vector.shape_cast %6 : vector<8xf32> to vector<8x1xf32>
    %cst_9 = arith.constant 3.200000e+01 : f32
    %8 = vector.broadcast %cst_9 : f32 to vector<8x1xf32>
    %9 = arith.divf %7, %8 : vector<8x1xf32>
    %10 = vector.broadcast %9 : vector<8x1xf32> to vector<8x32xf32>
    %11 = arith.subf %1, %10 : vector<8x32xf32>
    %12 = arith.mulf %11, %11 : vector<8x32xf32>
    %cst_10 = arith.constant dense<0.000000e+00> : vector<8xf32>
    %13 = vector.multi_reduction <add>, %12, %cst_10 [1] : vector<8x32xf32> to vector<8xf32>
    %14 = vector.shape_cast %13 : vector<8xf32> to vector<8x1xf32>
    %cst_11 = arith.constant 3.200000e+01 : f32
    %15 = vector.broadcast %cst_11 : f32 to vector<8x1xf32>
    %16 = arith.divf %14, %15 : vector<8x1xf32>
    %17 = vector.broadcast %9 : vector<8x1xf32> to vector<8x32xf32>
    %18 = arith.subf %1, %17 : vector<8x32xf32>
    %cst_12 = arith.constant 9.99999974E-6 : f32
    %19 = vector.broadcast %cst_12 : f32 to vector<8x1xf32>
    %20 = arith.addf %16, %19 : vector<8x1xf32>
    %21 = math.rsqrt %20 : vector<8x1xf32>
    %22 = vector.broadcast %21 : vector<8x1xf32> to vector<8x32xf32>
    %23 = arith.mulf %18, %22 : vector<8x32xf32>
    %24 = vector.broadcast %4 : vector<1x32xf32> to vector<8x32xf32>
    %25 = arith.mulf %23, %24 : vector<8x32xf32>
    %26 = vector.broadcast %5 : vector<1x32xf32> to vector<8x32xf32>
    %27 = arith.addf %25, %26 : vector<8x32xf32>
    %cst_13 = arith.constant dense<0.000000e+00> : vector<8xf32>
    %28 = vector.multi_reduction <add>, %3, %cst_13 [1] : vector<8x32xf32> to vector<8xf32>
    %29 = vector.shape_cast %28 : vector<8xf32> to vector<8x1xf32>
    %cst_14 = arith.constant 3.200000e+01 : f32
    %30 = vector.broadcast %cst_14 : f32 to vector<8x1xf32>
    %31 = arith.divf %29, %30 : vector<8x1xf32>
    %32 = vector.broadcast %31 : vector<8x1xf32> to vector<8x32xf32>
    %33 = arith.subf %3, %32 : vector<8x32xf32>
    %34 = arith.mulf %33, %33 : vector<8x32xf32>
    %cst_15 = arith.constant dense<0.000000e+00> : vector<8xf32>
    %35 = vector.multi_reduction <add>, %34, %cst_15 [1] : vector<8x32xf32> to vector<8xf32>
    %36 = vector.shape_cast %35 : vector<8xf32> to vector<8x1xf32>
    %cst_16 = arith.constant 3.200000e+01 : f32
    %37 = vector.broadcast %cst_16 : f32 to vector<8x1xf32>
    %38 = arith.divf %36, %37 : vector<8x1xf32>
    %39 = vector.broadcast %31 : vector<8x1xf32> to vector<8x32xf32>
    %40 = arith.subf %3, %39 : vector<8x32xf32>
    %cst_17 = arith.constant 9.99999974E-6 : f32
    %41 = vector.broadcast %cst_17 : f32 to vector<8x1xf32>
    %42 = arith.addf %38, %41 : vector<8x1xf32>
    %43 = math.rsqrt %42 : vector<8x1xf32>
    %44 = vector.broadcast %43 : vector<8x1xf32> to vector<8x32xf32>
    %45 = arith.mulf %40, %44 : vector<8x32xf32>
    %46 = vector.broadcast %4 : vector<1x32xf32> to vector<8x32xf32>
    %47 = arith.mulf %45, %46 : vector<8x32xf32>
    %48 = vector.broadcast %5 : vector<1x32xf32> to vector<8x32xf32>
    %49 = arith.addf %47, %48 : vector<8x32xf32>
    %50 = arith.truncf %27 : vector<8x32xf32> to vector<8x32xbf16>
    %c0_18 = arith.constant 0 : index
    %c0_19 = arith.constant 0 : index
    %51 = vector.load %arg6[%c0_18, %c0_19] : memref<32x32xbf16, #tpu.memory_space<vmem>>, vector<32x32xbf16>
    %cst_20 = arith.constant dense<0.000000e+00> : vector<8x32xf32>
    %52 = tpu.matmul %50, %51, %cst_20 {dimension_numbers = #tpu.dot_dimension_numbers<[1], [0], [0], [1], [0, 0, 1, 1], [], []>} : vector<8x32xbf16>, vector<32x32xbf16>, vector<8x32xf32> -> vector<8x32xf32>
    %53 = arith.truncf %49 : vector<8x32xf32> to vector<8x32xbf16>
    %c0_21 = arith.constant 0 : index
    %c0_22 = arith.constant 0 : index
    %54 = vector.load %arg7[%c0_21, %c0_22] : memref<32x64xbf16, #tpu.memory_space<vmem>>, vector<32x64xbf16>
    %cst_23 = arith.constant dense<0.000000e+00> : vector<8x64xf32>
    %55 = tpu.matmul %53, %54, %cst_23 {dimension_numbers = #tpu.dot_dimension_numbers<[1], [0], [0], [1], [0, 0, 1, 1], [], []>} : vector<8x32xbf16>, vector<32x64xbf16>, vector<8x64xf32> -> vector<8x64xf32>
    %56 = vector.extract_strided_slice %55 {offsets = [0, 0], sizes = [8, 32], strides = [1, 1]} : vector<8x64xf32> to vector<8x32xf32>
    %57 = vector.extract_strided_slice %55 {offsets = [0, 32], sizes = [8, 32], strides = [1, 1]} : vector<8x64xf32> to vector<8x32xf32>
    %58 = vector.shape_cast %52 : vector<8x32xf32> to vector<8x4x8xf32>
    %59 = tpu.transpose %58, [1, 0, 2] : vector<8x4x8xf32> -> vector<4x8x8xf32>
    %60 = vector.shape_cast %56 : vector<8x32xf32> to vector<8x4x8xf32>
    %61 = tpu.transpose %60, [1, 0, 2] : vector<8x4x8xf32> -> vector<4x8x8xf32>
    %62 = vector.shape_cast %57 : vector<8x32xf32> to vector<8x4x8xf32>
    %63 = tpu.transpose %62, [1, 0, 2] : vector<8x4x8xf32> -> vector<4x8x8xf32>
    %64 = arith.truncf %59 : vector<4x8x8xf32> to vector<4x8x8xbf16>
    %65 = arith.truncf %61 : vector<4x8x8xf32> to vector<4x8x8xbf16>
    "tpu.trace_start"() <{level = 10 : i32, message = "hnd,hmd->hnm"}> : () -> ()
    %cst_24 = arith.constant dense<0.000000e+00> : vector<4x8x8xf32>
    %66 = tpu.matmul %64, %65, %cst_24 {dimension_numbers = #tpu.dot_dimension_numbers<[2], [2], [1], [1], [0, 0, 0, 1, 1, 1], [0], [0]>} : vector<4x8x8xbf16>, vector<4x8x8xbf16>, vector<4x8x8xf32> -> vector<4x8x8xf32>
    "tpu.trace_stop"() : () -> ()
    %cst_25 = arith.constant 0.353553385 : f32
    %67 = vector.broadcast %cst_25 : f32 to vector<4x8x8xf32>
    %68 = arith.mulf %66, %67 : vector<4x8x8xf32>
    %cst_26 = arith.constant dense<0xFF800000> : vector<4x8xf32>
    %69 = vector.multi_reduction <maximumf>, %68, %cst_26 [2] : vector<4x8x8xf32> to vector<4x8xf32>
    %70 = vector.shape_cast %69 : vector<4x8xf32> to vector<4x8x1xf32>
    %71 = vector.broadcast %70 : vector<4x8x1xf32> to vector<4x8x8xf32>
    %72 = arith.subf %68, %71 : vector<4x8x8xf32>
    %73 = math.exp %72 : vector<4x8x8xf32>
    %cst_27 = arith.constant dense<0.000000e+00> : vector<4x8xf32>
    %74 = vector.multi_reduction <add>, %73, %cst_27 [2] : vector<4x8x8xf32> to vector<4x8xf32>
    %75 = vector.shape_cast %74 : vector<4x8xf32> to vector<4x8x1xf32>
    %76 = tpu.reciprocal %75 {approx = true} : vector<4x8x1xf32> -> vector<4x8x1xf32>
    %77 = vector.broadcast %76 : vector<4x8x1xf32> to vector<4x8x8xf32>
    %78 = arith.mulf %73, %77 : vector<4x8x8xf32>
    %79 = arith.truncf %78 : vector<4x8x8xf32> to vector<4x8x8xbf16>
    %80 = arith.truncf %63 : vector<4x8x8xf32> to vector<4x8x8xbf16>
    "tpu.trace_start"() <{level = 10 : i32, message = "hnm,hmd->hnd"}> : () -> ()
    %cst_28 = arith.constant dense<0.000000e+00> : vector<4x8x8xf32>
    %81 = tpu.matmul %79, %80, %cst_28 {dimension_numbers = #tpu.dot_dimension_numbers<[2], [1], [1], [2], [0, 0, 0, 1, 1, 2], [0], [0]>} : vector<4x8x8xbf16>, vector<4x8x8xbf16>, vector<4x8x8xf32> -> vector<4x8x8xf32>
    "tpu.trace_stop"() : () -> ()
    %82 = tpu.transpose %81, [1, 0, 2] : vector<4x8x8xf32> -> vector<8x4x8xf32>
    %83 = vector.shape_cast %82 : vector<8x4x8xf32> to vector<8x32xf32>
    %84 = arith.truncf %83 : vector<8x32xf32> to vector<8x32xbf16>
    %c0_29 = arith.constant 0 : index
    %c0_30 = arith.constant 0 : index
    %85 = vector.load %arg8[%c0_29, %c0_30] : memref<32x32xbf16, #tpu.memory_space<vmem>>, vector<32x32xbf16>
    %cst_31 = arith.constant dense<0.000000e+00> : vector<8x32xf32>
    %86 = tpu.matmul %84, %85, %cst_31 {dimension_numbers = #tpu.dot_dimension_numbers<[1], [0], [0], [1], [0, 0, 1, 1], [], []>} : vector<8x32xbf16>, vector<32x32xbf16>, vector<8x32xf32> -> vector<8x32xf32>
    %c0_32 = arith.constant 0 : index
    %c0_33 = arith.constant 0 : index
    %87 = vector.load %arg9[%c0_32, %c0_33] : memref<1x32xf32, #tpu.memory_space<vmem>>, vector<1x32xf32>
    %88 = vector.broadcast %87 : vector<1x32xf32> to vector<8x32xf32>
    %89 = arith.addf %86, %88 : vector<8x32xf32>
    %90 = arith.addf %1, %89 : vector<8x32xf32>
    %c0_34 = arith.constant 0 : index
    %c0_35 = arith.constant 0 : index
    %91 = vector.load %arg10[%c0_34, %c0_35] : memref<1x32xf32, #tpu.memory_space<vmem>>, vector<1x32xf32>
    %c0_36 = arith.constant 0 : index
    %c0_37 = arith.constant 0 : index
    %92 = vector.load %arg11[%c0_36, %c0_37] : memref<1x32xf32, #tpu.memory_space<vmem>>, vector<1x32xf32>
    %cst_38 = arith.constant dense<0.000000e+00> : vector<8xf32>
    %93 = vector.multi_reduction <add>, %90, %cst_38 [1] : vector<8x32xf32> to vector<8xf32>
    %94 = vector.shape_cast %93 : vector<8xf32> to vector<8x1xf32>
    %cst_39 = arith.constant 3.200000e+01 : f32
    %95 = vector.broadcast %cst_39 : f32 to vector<8x1xf32>
    %96 = arith.divf %94, %95 : vector<8x1xf32>
    %97 = vector.broadcast %96 : vector<8x1xf32> to vector<8x32xf32>
    %98 = arith.subf %90, %97 : vector<8x32xf32>
    %99 = arith.mulf %98, %98 : vector<8x32xf32>
    %cst_40 = arith.constant dense<0.000000e+00> : vector<8xf32>
    %100 = vector.multi_reduction <add>, %99, %cst_40 [1] : vector<8x32xf32> to vector<8xf32>
    %101 = vector.shape_cast %100 : vector<8xf32> to vector<8x1xf32>
    %cst_41 = arith.constant 3.200000e+01 : f32
    %102 = vector.broadcast %cst_41 : f32 to vector<8x1xf32>
    %103 = arith.divf %101, %102 : vector<8x1xf32>
    %104 = vector.broadcast %96 : vector<8x1xf32> to vector<8x32xf32>
    %105 = arith.subf %90, %104 : vector<8x32xf32>
    %cst_42 = arith.constant 9.99999974E-6 : f32
    %106 = vector.broadcast %cst_42 : f32 to vector<8x1xf32>
    %107 = arith.addf %103, %106 : vector<8x1xf32>
    %108 = math.rsqrt %107 : vector<8x1xf32>
    %109 = vector.broadcast %108 : vector<8x1xf32> to vector<8x32xf32>
    %110 = arith.mulf %105, %109 : vector<8x32xf32>
    %111 = vector.broadcast %91 : vector<1x32xf32> to vector<8x32xf32>
    %112 = arith.mulf %110, %111 : vector<8x32xf32>
    %113 = vector.broadcast %92 : vector<1x32xf32> to vector<8x32xf32>
    %114 = arith.addf %112, %113 : vector<8x32xf32>
    %115 = arith.truncf %114 : vector<8x32xf32> to vector<8x32xbf16>
    %c0_43 = arith.constant 0 : index
    %c0_44 = arith.constant 0 : index
    %116 = vector.load %arg12[%c0_43, %c0_44] : memref<32x128xbf16, #tpu.memory_space<vmem>>, vector<32x128xbf16>
    %cst_45 = arith.constant dense<0.000000e+00> : vector<8x128xf32>
    %117 = tpu.matmul %115, %116, %cst_45 {dimension_numbers = #tpu.dot_dimension_numbers<[1], [0], [0], [1], [0, 0, 1, 1], [], []>} : vector<8x32xbf16>, vector<32x128xbf16>, vector<8x128xf32> -> vector<8x128xf32>
    %c0_46 = arith.constant 0 : index
    %c0_47 = arith.constant 0 : index
    %118 = vector.load %arg13[%c0_46, %c0_47] : memref<1x128xf32, #tpu.memory_space<vmem>>, vector<1x128xf32>
    %119 = vector.broadcast %118 : vector<1x128xf32> to vector<8x128xf32>
    %120 = arith.addf %117, %119 : vector<8x128xf32>
    %cst_48 = arith.constant 0.000000e+00 : f32
    %121 = vector.broadcast %cst_48 : f32 to vector<8x128xf32>
    %122 = arith.maximumf %120, %121 : vector<8x128xf32>
    %123 = arith.truncf %122 : vector<8x128xf32> to vector<8x128xbf16>
    %c0_49 = arith.constant 0 : index
    %c0_50 = arith.constant 0 : index
    %124 = vector.load %arg14[%c0_49, %c0_50] : memref<128x32xbf16, #tpu.memory_space<vmem>>, vector<128x32xbf16>
    %cst_51 = arith.constant dense<0.000000e+00> : vector<8x32xf32>
    %125 = tpu.matmul %123, %124, %cst_51 {dimension_numbers = #tpu.dot_dimension_numbers<[1], [0], [0], [1], [0, 0, 1, 1], [], []>} : vector<8x128xbf16>, vector<128x32xbf16>, vector<8x32xf32> -> vector<8x32xf32>
    %c0_52 = arith.constant 0 : index
    %c0_53 = arith.constant 0 : index
    %126 = vector.load %arg15[%c0_52, %c0_53] : memref<1x32xf32, #tpu.memory_space<vmem>>, vector<1x32xf32>
    %127 = vector.broadcast %126 : vector<1x32xf32> to vector<8x32xf32>
    %128 = arith.addf %125, %127 : vector<8x32xf32>
    %129 = arith.addf %90, %128 : vector<8x32xf32>
    %c0_54 = arith.constant 0 : index
    %c0_55 = arith.constant 0 : index
    %c0_56 = arith.constant 0 : index
    %130 = vector.load %arg16[%c0_54, %c0_55, %c0_56] : memref<1x8x32xf32, #tpu.memory_space<vmem>>, vector<1x8x32xf32>
    %131 = vector.shape_cast %130 : vector<1x8x32xf32> to vector<8x32xf32>
    %132 = vector.shape_cast %129 : vector<8x32xf32> to vector<1x8x32xf32>
    tpu.vector_store %arg16[%c0_54, %c0_55, %c0_56], %132 {strides = array<i32>} : memref<1x8x32xf32, #tpu.memory_space<vmem>>, vector<1x8x32xf32>,
    return
  }
  func.func @transform_0(%arg0: i32, %arg1: i32) -> (i32, i32, i32) {
    %c0_i32 = arith.constant 0 : i32
    %c0_i32_0 = arith.constant 0 : i32
    return %arg0, %arg1, %c0_i32 : i32, i32, i32
  }
  func.func @transform_1(%arg0: i32, %arg1: i32) -> (i32, i32, i32) {
    %c0_i32 = arith.constant 0 : i32
    %c0_i32_0 = arith.constant 0 : i32
    %c0_i32_1 = arith.constant 0 : i32
    return %arg0, %c0_i32, %c0_i32_0 : i32, i32, i32
  }
  func.func @transform_2(%arg0: i32, %arg1: i32) -> (i32, i32) {
    %c0_i32 = arith.constant 0 : i32
    %c0_i32_0 = arith.constant 0 : i32
    %c0_i32_1 = arith.constant 0 : i32
    return %c0_i32, %c0_i32_0 : i32, i32
  }
  func.func @transform_3(%arg0: i32, %arg1: i32) -> (i32, i32) {
    %c0_i32 = arith.constant 0 : i32
    %c0_i32_0 = arith.constant 0 : i32
    %c0_i32_1 = arith.constant 0 : i32
    return %c0_i32, %c0_i32_0 : i32, i32
  }
  func.func @transform_4(%arg0: i32, %arg1: i32) -> (i32, i32) {
    %c0_i32 = arith.constant 0 : i32
    %c0_i32_0 = arith.constant 0 : i32
    %c0_i32_1 = arith.constant 0 : i32
    return %c0_i32, %c0_i32_0 : i32, i32
  }
  func.func @transform_5(%arg0: i32, %arg1: i32) -> (i32, i32) {
    %c0_i32 = arith.constant 0 : i32
    %c0_i32_0 = arith.constant 0 : i32
    %c0_i32_1 = arith.constant 0 : i32
    return %c0_i32, %c0_i32_0 : i32, i32
  }
  func.func @transform_6(%arg0: i32, %arg1: i32) -> (i32, i32) {
    %c0_i32 = arith.constant 0 : i32
    %c0_i32_0 = arith.constant 0 : i32
    %c0_i32_1 = arith.constant 0 : i32
    return %c0_i32, %c0_i32_0 : i32, i32
  }
  func.func @transform_7(%arg0: i32, %arg1: i32) -> (i32, i32) {
    %c0_i32 = arith.constant 0 : i32
    %c0_i32_0 = arith.constant 0 : i32
    %c0_i32_1 = arith.constant 0 : i32
    return %c0_i32, %c0_i32_0 : i32, i32
  }
  func.func @transform_8(%arg0: i32, %arg1: i32) -> (i32, i32) {
    %c0_i32 = arith.constant 0 : i32
    %c0_i32_0 = arith.constant 0 : i32
    %c0_i32_1 = arith.constant 0 : i32
    return %c0_i32, %c0_i32_0 : i32, i32
  }
  func.func @transform_9(%arg0: i32, %arg1: i32) -> (i32, i32) {
    %c0_i32 = arith.constant 0 : i32
    %c0_i32_0 = arith.constant 0 : i32
    %c0_i32_1 = arith.constant 0 : i32
    return %c0_i32, %c0_i32_0 : i32, i32
  }
  func.func @transform_10(%arg0: i32, %arg1: i32) -> (i32, i32) {
    %c0_i32 = arith.constant 0 : i32
    %c0_i32_0 = arith.constant 0 : i32
    %c0_i32_1 = arith.constant 0 : i32
    return %c0_i32, %c0_i32_0 : i32, i32
  }
  func.func @transform_11(%arg0: i32, %arg1: i32) -> (i32, i32) {
    %c0_i32 = arith.constant 0 : i32
    %c0_i32_0 = arith.constant 0 : i32
    %c0_i32_1 = arith.constant 0 : i32
    return %c0_i32, %c0_i32_0 : i32, i32
  }
  func.func @transform_12(%arg0: i32, %arg1: i32) -> (i32, i32) {
    %c0_i32 = arith.constant 0 : i32
    %c0_i32_0 = arith.constant 0 : i32
    %c0_i32_1 = arith.constant 0 : i32
    return %c0_i32, %c0_i32_0 : i32, i32
  }
  func.func @transform_13(%arg0: i32, %arg1: i32) -> (i32, i32) {
    %c0_i32 = arith.constant 0 : i32
    %c0_i32_0 = arith.constant 0 : i32
    %c0_i32_1 = arith.constant 0 : i32
    return %c0_i32, %c0_i32_0 : i32, i32
  }
  func.func @transform_14(%arg0: i32, %arg1: i32) -> (i32, i32, i32) {
    %c0_i32 = arith.constant 0 : i32
    %c0_i32_0 = arith.constant 0 : i32
    return %arg0, %arg1, %c0_i32 : i32, i32, i32
  }
}

</mosaic_0001>

<llo_original>
// kernel: tpu_custom_call.1
$region0: #{tpu_custom_call.1}
  #allocation0 [shape = 'u32[]', space=smem, size = 0x4, offset = 0x4, fixed_abs, tag = 'smem constant byte address 0x4 - core index']
  #allocation1 [shape = 'u32[144,128]{1,0:T(1,128)}', space=vmem, size = 0x12000, scoped, tag = 'internal scratch']
  %s0 = inlined_call_operand.vmem [shape: f32[2,8,32], index: 0, kind: input, shape index: {}]
  %s1 = inlined_call_operand.vmem [shape: f32[2,8,32], index: 1, kind: input, shape index: {}]
  %s2 = inlined_call_operand.vmem [shape: f32[1,32], index: 2, kind: input, shape index: {}]
  %s3 = inlined_call_operand.vmem [shape: f32[1,32], index: 3, kind: input, shape index: {}]
  %s4 = inlined_call_operand.vmem [shape: bf16[32,32], index: 4, kind: input, shape index: {}]
  %s5 = inlined_call_operand.vmem [shape: bf16[32,64], index: 5, kind: input, shape index: {}]
  %s6 = inlined_call_operand.vmem [shape: bf16[32,32], index: 6, kind: input, shape index: {}]
  %s7 = inlined_call_operand.hbm [shape: f32[1,32], index: 7, kind: input, shape index: {}]
  %s8 = inlined_call_operand.hbm [shape: f32[1,32], index: 8, kind: input, shape index: {}]
  %s9 = inlined_call_operand.hbm [shape: f32[1,32], index: 9, kind: input, shape index: {}]
  %s10 = inlined_call_operand.vmem [shape: bf16[32,128], index: 10, kind: input, shape index: {}]
  %s11 = inlined_call_operand.vmem [shape: f32[1,128], index: 11, kind: input, shape index: {}]
  %s12 = inlined_call_operand.vmem [shape: bf16[128,32], index: 12, kind: input, shape index: {}]
  %s13 = inlined_call_operand.vmem [shape: f32[1,32], index: 13, kind: input, shape index: {}]
  %s14 = inlined_call_operand.hbm [shape: f32[2,8,32], index: 14, kind: output, shape index: {}]
  %s15 = sld [smem:[#allocation0]]
  $region101: #{tpu_custom_call.1} parent=0
    _
  %s17 = ssub.s32 1, %s15
  %s18 = scalar_select 0, %s17, %s15
  $region1: #{tpu_custom_call.1} parent=0
    #allocation2 [shape = 'u8[512]{0}', space=vmem, size = 0x400, scoped, tag = 'input window, operand 7, single buffered']
    #allocation3 [shape = 's32[2]{0}', space=sflag, size = 0x8, scoped, tag = 'scoped memory for tpu_custom_call.1']
    #allocation4 [shape = 's32[2]{0}', space=sflag, size = 0x8, scoped, tag = 'scoped memory for tpu_custom_call.1']
    #allocation5 [shape = 'u8[512]{0}', space=vmem, size = 0x400, scoped, tag = 'input window, operand 8, single buffered']
    #allocation6 [shape = 's32[1]{0}', space=sflag, size = 0x4, scoped, tag = 'scoped memory for tpu_custom_call.1']
    #allocation7 [shape = 'u8[512]{0}', space=vmem, size = 0x400, scoped, tag = 'input window, operand 9, single buffered']
    #allocation8 [shape = 'u8[8192]{0}', space=vmem, size = 0x2000, scoped, tag = 'output window, operand 0']
    %19 = vsyncpa [#allocation3], 0
    %20 = vsyncpa [#allocation6], 0
    %21 = vsyncpa [#allocation4], 0
    %s22 = scalar_lea.sflag [#allocation4], 1
    %23 = vsyncpa %s22, 0
    loop: start=0, step=1, limit=4
    $region2: #{tpu_custom_call.1} parent=1 // loop_pre_header
      _
    $region3: #{tpu_custom_call.1} parent=1 // loop_header
      %s25 = sphi 0, %s29
      %p26 = scmp.ge.s32.totalorder %s25, 4
      %s32 = sphi 0, %s44
      %s33 = sphi 0, %s40
      %s34 = sphi 0, %s32
      %s35 = sphi 0, %s33
      %s36 = sphi 0, %s34
      %s37 = sphi 0, %s35
      %s49 = sphi 0, %s51
      %s52 = sphi 0, %s49
      %s53 = sphi 0, %s52
      %s69 = sphi 0, %s53
      %s75 = sphi 0, %s77
      %s78 = sphi 0, %s75
      %s79 = sphi 0, %s78
      %s95 = sphi 0, %s79
      %s99 = sphi 0, %s99
      %s101 = sphi 0, %s99
      %s102 = sphi 0, %s101
      %s116 = sphi 0, %s102
      %s120 = sphi 0, %s120
      %s122 = sphi 0, %s120
      %s123 = sphi 0, %s122
      %s137 = sphi 0, %s123
      %s141 = sphi 0, %s141
      %s143 = sphi 0, %s141
      %s144 = sphi 0, %s143
      %s158 = sphi 0, %s144
      %s162 = sphi 0, %s162
      %s164 = sphi 0, %s162
      %s165 = sphi 0, %s164
      %s179 = sphi 0, %s165
      %s183 = sphi 0, %s183
      %s185 = sphi 0, %s183
      %s186 = sphi 0, %s185
      %s200 = sphi 0, %s186
      %s204 = sphi 0, %s204
      %s206 = sphi 0, %s204
      %s207 = sphi 0, %s206
      %s221 = sphi 0, %s207
      %s225 = sphi 0, %s225
      %s227 = sphi 0, %s225
      %s228 = sphi 0, %s227
      %s242 = sphi 0, %s228
      %s246 = sphi 0, %s246
      %s248 = sphi 0, %s246
      %s249 = sphi 0, %s248
      %s263 = sphi 0, %s249
      %s267 = sphi 0, %s267
      %s269 = sphi 0, %s267
      %s270 = sphi 0, %s269
      %s284 = sphi 0, %s270
      %s288 = sphi 0, %s288
      %s290 = sphi 0, %s288
      %s291 = sphi 0, %s290
      %s305 = sphi 0, %s291
      %s309 = sphi 0, %s309
      %s311 = sphi 0, %s309
      %s312 = sphi 0, %s311
      %s326 = sphi 0, %s312
      %s330 = sphi 0, %s330
      %s332 = sphi 0, %s330
      %s333 = sphi 0, %s332
      %s347 = sphi 0, %s333
      %s355 = sphi 0, %s357
      %s358 = sphi 0, %s355
      %s359 = sphi 0, %s358
      %s375 = sphi 0, %s359
    $region4: #{tpu_custom_call.1} parent=1 // loop_header_branch
      %28 = sbr.rel (%p26) target = $region8
    $region5: #{tpu_custom_call.1} parent=1 // loop_body
      %s30 = ssub.s32 %s25, 1
      %s31 = ssub.s32 %s25, 2
      %s38 = sadd.s32 1, %s33
      %p39 = scmp.ge.s32.totalorder %s38, 1
      %s40 = scalar_select %p39, 0, %s38
      %s41 = sadd.s32 1, %s32
      %s42 = scalar_select %p39, %s41, %s32
      %p43 = scmp.ge.s32.totalorder %s42, 2
      %s44 = scalar_select %p43, 0, %s42
      %s45 = ssub.s32 %s32, %s44
      %s46 = ssub.s32 %s33, %s40
      %s47 = sor.u32 %s45, %s46
      %p48 = scmp.eq.s32.totalorder %s47, 0
      %s50 = sadd.s32 %s49, 1
      %s51 = scalar_select %p48, %s49, %s50
      %p54 = pneg %p48
      %p55 = scmp.eq.s32.totalorder %s25, 1
      %p56 = por %p54, %p55
      %p57 = scmp.ne.s32.totalorder %s49, %s52
      %p58 = scmp.eq.s32.totalorder %s25, 0
      %p59 = por %p57, %p58
      %p60 = scmp.ne.s32.totalorder %s49, %s52
      %p61 = scmp.eq.s32.totalorder %s30, 1
      %p62 = por %p60, %p61
      %p63 = scmp.ne.s32.totalorder %s52, %s53
      %p64 = scmp.eq.s32.totalorder %s30, 0
      %p65 = por %p63, %p64
      %p66 = scmp.ne.s32.totalorder %s52, %s53
      %p67 = scmp.eq.s32.totalorder %s31, 1
      %p68 = por %p66, %p67
      %p70 = scmp.ne.s32.totalorder %s53, %s69
      %p71 = scmp.eq.s32.totalorder %s31, 0
      %p72 = por %p70, %p71
      %s73 = ssub.s32 %s32, %s44
      %p74 = scmp.eq.s32.totalorder %s73, 0
      %s76 = sadd.s32 %s75, 1
      %s77 = scalar_select %p74, %s75, %s76
      %p80 = pneg %p74
      %p81 = scmp.eq.s32.totalorder %s25, 1
      %p82 = por %p80, %p81
      %p83 = scmp.ne.s32.totalorder %s75, %s78
      %p84 = scmp.eq.s32.totalorder %s25, 0
      %p85 = por %p83, %p84
      %p86 = scmp.ne.s32.totalorder %s75, %s78
      %p87 = scmp.eq.s32.totalorder %s30, 1
      %p88 = por %p86, %p87
      %p89 = scmp.ne.s32.totalorder %s78, %s79
      %p90 = scmp.eq.s32.totalorder %s30, 0
      %p91 = por %p89, %p90
      %p92 = scmp.ne.s32.totalorder %s78, %s79
      %p93 = scmp.eq.s32.totalorder %s31, 1
      %p94 = por %p92, %p93
      %p96 = scmp.ne.s32.totalorder %s79, %s95
      %p97 = scmp.eq.s32.totalorder %s31, 0
      %p98 = por %p96, %p97
      %s100 = sadd.s32 %s99, 1
      %p103 = scmp.eq.s32.totalorder %s25, 1
      %p104 = scmp.ne.s32.totalorder %s99, %s101
      %p105 = scmp.eq.s32.totalorder %s25, 0
      %p106 = por %p104, %p105
      %p107 = scmp.ne.s32.totalorder %s99, %s101
      %p108 = scmp.eq.s32.totalorder %s30, 1
      %p109 = por %p107, %p108
      %p110 = scmp.ne.s32.totalorder %s101, %s102
      %p111 = scmp.eq.s32.totalorder %s30, 0
      %p112 = por %p110, %p111
      %p113 = scmp.ne.s32.totalorder %s101, %s102
      %p114 = scmp.eq.s32.totalorder %s31, 1
      %p115 = por %p113, %p114
      %p117 = scmp.ne.s32.totalorder %s102, %s116
      %p118 = scmp.eq.s32.totalorder %s31, 0
      %p119 = por %p117, %p118
      %s121 = sadd.s32 %s120, 1
      %p124 = scmp.eq.s32.totalorder %s25, 1
      %p125 = scmp.ne.s32.totalorder %s120, %s122
      %p126 = scmp.eq.s32.totalorder %s25, 0
      %p127 = por %p125, %p126
      %p128 = scmp.ne.s32.totalorder %s120, %s122
      %p129 = scmp.eq.s32.totalorder %s30, 1
      %p130 = por %p128, %p129
      %p131 = scmp.ne.s32.totalorder %s122, %s123
      %p132 = scmp.eq.s32.totalorder %s30, 0
      %p133 = por %p131, %p132
      %p134 = scmp.ne.s32.totalorder %s122, %s123
      %p135 = scmp.eq.s32.totalorder %s31, 1
      %p136 = por %p134, %p135
      %p138 = scmp.ne.s32.totalorder %s123, %s137
      %p139 = scmp.eq.s32.totalorder %s31, 0
      %p140 = por %p138, %p139
      %s142 = sadd.s32 %s141, 1
      %p145 = scmp.eq.s32.totalorder %s25, 1
      %p146 = scmp.ne.s32.totalorder %s141, %s143
      %p147 = scmp.eq.s32.totalorder %s25, 0
      %p148 = por %p146, %p147
      %p149 = scmp.ne.s32.totalorder %s141, %s143
      %p150 = scmp.eq.s32.totalorder %s30, 1
      %p151 = por %p149, %p150
      %p152 = scmp.ne.s32.totalorder %s143, %s144
      %p153 = scmp.eq.s32.totalorder %s30, 0
      %p154 = por %p152, %p153
      %p155 = scmp.ne.s32.totalorder %s143, %s144
      %p156 = scmp.eq.s32.totalorder %s31, 1
      %p157 = por %p155, %p156
      %p159 = scmp.ne.s32.totalorder %s144, %s158
      %p160 = scmp.eq.s32.totalorder %s31, 0
      %p161 = por %p159, %p160
      %s163 = sadd.s32 %s162, 1
      %p166 = scmp.eq.s32.totalorder %s25, 1
      %p167 = scmp.ne.s32.totalorder %s162, %s164
      %p168 = scmp.eq.s32.totalorder %s25, 0
      %p169 = por %p167, %p168
      %p170 = scmp.ne.s32.totalorder %s162, %s164
      %p171 = scmp.eq.s32.totalorder %s30, 1
      %p172 = por %p170, %p171
      %p173 = scmp.ne.s32.totalorder %s164, %s165
      %p174 = scmp.eq.s32.totalorder %s30, 0
      %p175 = por %p173, %p174
      %p176 = scmp.ne.s32.totalorder %s164, %s165
      %p177 = scmp.eq.s32.totalorder %s31, 1
      %p178 = por %p176, %p177
      %p180 = scmp.ne.s32.totalorder %s165, %s179
      %p181 = scmp.eq.s32.totalorder %s31, 0
      %p182 = por %p180, %p181
      %s184 = sadd.s32 %s183, 1
      %p187 = scmp.eq.s32.totalorder %s25, 1
      %p188 = scmp.ne.s32.totalorder %s183, %s185
      %p189 = scmp.eq.s32.totalorder %s25, 0
      %p190 = por %p188, %p189
      %p191 = scmp.ne.s32.totalorder %s183, %s185
      %p192 = scmp.eq.s32.totalorder %s30, 1
      %p193 = por %p191, %p192
      %p194 = scmp.ne.s32.totalorder %s185, %s186
      %p195 = scmp.eq.s32.totalorder %s30, 0
      %p196 = por %p194, %p195
      %p197 = scmp.ne.s32.totalorder %s185, %s186
      %p198 = scmp.eq.s32.totalorder %s31, 1
      %p199 = por %p197, %p198
      %p201 = scmp.ne.s32.totalorder %s186, %s200
      %p202 = scmp.eq.s32.totalorder %s31, 0
      %p203 = por %p201, %p202
      %s205 = sadd.s32 %s204, 1
      %p208 = scmp.eq.s32.totalorder %s25, 1
      %p209 = scmp.ne.s32.totalorder %s204, %s206
      %p210 = scmp.eq.s32.totalorder %s25, 0
      %p211 = por %p209, %p210
      %p212 = scmp.ne.s32.totalorder %s204, %s206
      %p213 = scmp.eq.s32.totalorder %s30, 1
      %p214 = por %p212, %p213
      %p215 = scmp.ne.s32.totalorder %s206, %s207
      %p216 = scmp.eq.s32.totalorder %s30, 0
      %p217 = por %p215, %p216
      %p218 = scmp.ne.s32.totalorder %s206, %s207
      %p219 = scmp.eq.s32.totalorder %s31, 1
      %p220 = por %p218, %p219
      %p222 = scmp.ne.s32.totalorder %s207, %s221
      %p223 = scmp.eq.s32.totalorder %s31, 0
      %p224 = por %p222, %p223
      %s226 = sadd.s32 %s225, 1
      %p229 = scmp.eq.s32.totalorder %s25, 1
      %p230 = scmp.ne.s32.totalorder %s225, %s227
      %p231 = scmp.eq.s32.totalorder %s25, 0
      %p232 = por %p230, %p231
      %p233 = scmp.ne.s32.totalorder %s225, %s227
      %p234 = scmp.eq.s32.totalorder %s30, 1
      %p235 = por %p233, %p234
      %p236 = scmp.ne.s32.totalorder %s227, %s228
      %p237 = scmp.eq.s32.totalorder %s30, 0
      %p238 = por %p236, %p237
      %p239 = scmp.ne.s32.totalorder %s227, %s228
      %p240 = scmp.eq.s32.totalorder %s31, 1
      %p241 = por %p239, %p240
      %p243 = scmp.ne.s32.totalorder %s228, %s242
      %p244 = scmp.eq.s32.totalorder %s31, 0
      %p245 = por %p243, %p244
      %s247 = sadd.s32 %s246, 1
      %p250 = scmp.eq.s32.totalorder %s25, 1
      %p251 = scmp.ne.s32.totalorder %s246, %s248
      %p252 = scmp.eq.s32.totalorder %s25, 0
      %p253 = por %p251, %p252
      %p254 = scmp.ne.s32.totalorder %s246, %s248
      %p255 = scmp.eq.s32.totalorder %s30, 1
      %p256 = por %p254, %p255
      %p257 = scmp.ne.s32.totalorder %s248, %s249
      %p258 = scmp.eq.s32.totalorder %s30, 0
      %p259 = por %p257, %p258
      %p260 = scmp.ne.s32.totalorder %s248, %s249
      %p261 = scmp.eq.s32.totalorder %s31, 1
      %p262 = por %p260, %p261
      %p264 = scmp.ne.s32.totalorder %s249, %s263
      %p265 = scmp.eq.s32.totalorder %s31, 0
      %p266 = por %p264, %p265
      %s268 = sadd.s32 %s267, 1
      %p271 = scmp.eq.s32.totalorder %s25, 1
      %p272 = scmp.ne.s32.totalorder %s267, %s269
      %p273 = scmp.eq.s32.totalorder %s25, 0
      %p274 = por %p272, %p273
      %p275 = scmp.ne.s32.totalorder %s267, %s269
      %p276 = scmp.eq.s32.totalorder %s30, 1
      %p277 = por %p275, %p276
      %p278 = scmp.ne.s32.totalorder %s269, %s270
      %p279 = scmp.eq.s32.totalorder %s30, 0
      %p280 = por %p278, %p279
      %p281 = scmp.ne.s32.totalorder %s269, %s270
      %p282 = scmp.eq.s32.totalorder %s31, 1
      %p283 = por %p281, %p282
      %p285 = scmp.ne.s32.totalorder %s270, %s284
      %p286 = scmp.eq.s32.totalorder %s31, 0
      %p287 = por %p285, %p286
      %s289 = sadd.s32 %s288, 1
      %p292 = scmp.eq.s32.totalorder %s25, 1
      %p293 = scmp.ne.s32.totalorder %s288, %s290
      %p294 = scmp.eq.s32.totalorder %s25, 0
      %p295 = por %p293, %p294
      %p296 = scmp.ne.s32.totalorder %s288, %s290
      %p297 = scmp.eq.s32.totalorder %s30, 1
      %p298 = por %p296, %p297
      %p299 = scmp.ne.s32.totalorder %s290, %s291
      %p300 = scmp.eq.s32.totalorder %s30, 0
      %p301 = por %p299, %p300
      %p302 = scmp.ne.s32.totalorder %s290, %s291
      %p303 = scmp.eq.s32.totalorder %s31, 1
      %p304 = por %p302, %p303
      %p306 = scmp.ne.s32.totalorder %s291, %s305
      %p307 = scmp.eq.s32.totalorder %s31, 0
      %p308 = por %p306, %p307
      %s310 = sadd.s32 %s309, 1
      %p313 = scmp.eq.s32.totalorder %s25, 1
      %p314 = scmp.ne.s32.totalorder %s309, %s311
      %p315 = scmp.eq.s32.totalorder %s25, 0
      %p316 = por %p314, %p315
      %p317 = scmp.ne.s32.totalorder %s309, %s311
      %p318 = scmp.eq.s32.totalorder %s30, 1
      %p319 = por %p317, %p318
      %p320 = scmp.ne.s32.totalorder %s311, %s312
      %p321 = scmp.eq.s32.totalorder %s30, 0
      %p322 = por %p320, %p321
      %p323 = scmp.ne.s32.totalorder %s311, %s312
      %p324 = scmp.eq.s32.totalorder %s31, 1
      %p325 = por %p323, %p324
      %p327 = scmp.ne.s32.totalorder %s312, %s326
      %p328 = scmp.eq.s32.totalorder %s31, 0
      %p329 = por %p327, %p328
      %s331 = sadd.s32 %s330, 1
      %p334 = scmp.eq.s32.totalorder %s25, 1
      %p335 = scmp.ne.s32.totalorder %s330, %s332
      %p336 = scmp.eq.s32.totalorder %s25, 0
      %p337 = por %p335, %p336
      %p338 = scmp.ne.s32.totalorder %s330, %s332
      %p339 = scmp.eq.s32.totalorder %s30, 1
      %p340 = por %p338, %p339
      %p341 = scmp.ne.s32.totalorder %s332, %s333
      %p342 = scmp.eq.s32.totalorder %s30, 0
      %p343 = por %p341, %p342
      %p344 = scmp.ne.s32.totalorder %s332, %s333
      %p345 = scmp.eq.s32.totalorder %s31, 1
      %p346 = por %p344, %p345
      %p348 = scmp.ne.s32.totalorder %s333, %s347
      %p349 = scmp.eq.s32.totalorder %s31, 0
      %p350 = por %p348, %p349
      %s351 = ssub.s32 %s32, %s44
      %s352 = ssub.s32 %s33, %s40
      %s353 = sor.u32 %s351, %s352
      %p354 = scmp.eq.s32.totalorder %s353, 0
      %s356 = sadd.s32 %s355, 1
      %s357 = scalar_select %p354, %s355, %s356
      %p360 = pneg %p354
      %p361 = scmp.eq.s32.totalorder %s25, 1
      %p362 = por %p360, %p361
      %p363 = scmp.ne.s32.totalorder %s355, %s358
      %p364 = scmp.eq.s32.totalorder %s25, 0
      %p365 = por %p363, %p364
      %p366 = scmp.ne.s32.totalorder %s355, %s358
      %p367 = scmp.eq.s32.totalorder %s30, 1
      %p368 = por %p366, %p367
      %p369 = scmp.ne.s32.totalorder %s358, %s359
      %p370 = scmp.eq.s32.totalorder %s30, 0
      %p371 = por %p369, %p370
      %p372 = scmp.ne.s32.totalorder %s358, %s359
      %p373 = scmp.eq.s32.totalorder %s31, 1
      %p374 = por %p372, %p373
      %p376 = scmp.ne.s32.totalorder %s359, %s375
      %p377 = scmp.eq.s32.totalorder %s31, 0
      %p378 = por %p376, %p377
      %p379 = scmp.le.s32.totalorder 1, %s25
      %p380 = scmp.lt.s32.totalorder %s25, 3
      %p381 = pnand %p379, %p380
      %p382 = pneg %p381
      // Predicated region
      $region9: #{tpu_custom_call.1} parent=5 // pred_check
        _
      $region10: #{tpu_custom_call.1} parent=5 // pred_check_branch
        %384 = sbr.rel (%p381) target = $region12
      $region11: #{tpu_custom_call.1} parent=5 // pred_region
        %s385 = ssub.s32 %s25, 1
        // Predicated region
        $region13: #{tpu_custom_call.1} parent=11 // pred_check
          %p386 = pneg %p112
        $region14: #{tpu_custom_call.1} parent=11 // pred_check_branch
          %388 = sbr.rel (%p386) target = $region16
        $region15: #{tpu_custom_call.1} parent=11 // pred_region
          _
        $region16: #{tpu_custom_call.1} parent=11 // pred_fallthru
          _
        // Predicated region
        $region17: #{tpu_custom_call.1} parent=11 // pred_check
          %p389 = pneg %p133
        $region18: #{tpu_custom_call.1} parent=11 // pred_check_branch
          %391 = sbr.rel (%p389) target = $region20
        $region19: #{tpu_custom_call.1} parent=11 // pred_region
          _
        $region20: #{tpu_custom_call.1} parent=11 // pred_fallthru
          _
        // Predicated region
        $region21: #{tpu_custom_call.1} parent=11 // pred_check
          %p392 = pneg %p154
        $region22: #{tpu_custom_call.1} parent=11 // pred_check_branch
          %394 = sbr.rel (%p392) target = $region24
        $region23: #{tpu_custom_call.1} parent=11 // pred_region
          _
        $region24: #{tpu_custom_call.1} parent=11 // pred_fallthru
          _
        // Predicated region
        $region25: #{tpu_custom_call.1} parent=11 // pred_check
          %p395 = pneg %p175
        $region26: #{tpu_custom_call.1} parent=11 // pred_check_branch
          %397 = sbr.rel (%p395) target = $region28
        $region27: #{tpu_custom_call.1} parent=11 // pred_region
          _
        $region28: #{tpu_custom_call.1} parent=11 // pred_fallthru
          _
        // Predicated region
        $region29: #{tpu_custom_call.1} parent=11 // pred_check
          %p398 = pneg %p196
        $region30: #{tpu_custom_call.1} parent=11 // pred_check_branch
          %400 = sbr.rel (%p398) target = $region32
        $region31: #{tpu_custom_call.1} parent=11 // pred_region
          _
        $region32: #{tpu_custom_call.1} parent=11 // pred_fallthru
          _
        // Predicated region
        $region33: #{tpu_custom_call.1} parent=11 // pred_check
          %p401 = pneg %p217
        $region34: #{tpu_custom_call.1} parent=11 // pred_check_branch
          %403 = sbr.rel (%p401) target = $region36
        $region35: #{tpu_custom_call.1} parent=11 // pred_region
          %s405 = ssub.s32 16, 16
          %406 = vsyncadd [#allocation3], %s405
          %s408 = sshll.u32 [#allocation2], 4
          %s409 = int_to_ptr.vmem [resolvable:$true] %s408
          %411 = dma.hbm_to_vmem [thread:$0]  %s7, 16, %s409, [#allocation3]
        $region36: #{tpu_custom_call.1} parent=11 // pred_fallthru
          _
        // Predicated region
        $region37: #{tpu_custom_call.1} parent=11 // pred_check
          %p412 = pneg %p238
        $region38: #{tpu_custom_call.1} parent=11 // pred_check_branch
          %414 = sbr.rel (%p412) target = $region40
        $region39: #{tpu_custom_call.1} parent=11 // pred_region
          %s416 = ssub.s32 16, 16
          %417 = vsyncadd [#allocation6], %s416
          %s419 = sshll.u32 [#allocation5], 4
          %s420 = int_to_ptr.vmem [resolvable:$true] %s419
          %422 = dma.hbm_to_vmem [thread:$0]  %s8, 16, %s420, [#allocation6]
        $region40: #{tpu_custom_call.1} parent=11 // pred_fallthru
          _
        // Predicated region
        $region41: #{tpu_custom_call.1} parent=11 // pred_check
          %p423 = pneg %p259
        $region42: #{tpu_custom_call.1} parent=11 // pred_check_branch
          %425 = sbr.rel (%p423) target = $region44
        $region43: #{tpu_custom_call.1} parent=11 // pred_region
          %s427 = ssub.s32 16, 16
          %428 = vsyncadd [#allocation6], %s427
          %s430 = sshll.u32 [#allocation7], 4
          %s431 = int_to_ptr.vmem [resolvable:$true] %s430
          %433 = dma.hbm_to_vmem [thread:$0]  %s9, 16, %s431, [#allocation6]
        $region44: #{tpu_custom_call.1} parent=11 // pred_fallthru
          _
        // Predicated region
        $region45: #{tpu_custom_call.1} parent=11 // pred_check
          %p434 = pneg %p280
        $region46: #{tpu_custom_call.1} parent=11 // pred_check_branch
          %436 = sbr.rel (%p434) target = $region48
        $region47: #{tpu_custom_call.1} parent=11 // pred_region
          _
        $region48: #{tpu_custom_call.1} parent=11 // pred_fallthru
          _
        // Predicated region
        $region49: #{tpu_custom_call.1} parent=11 // pred_check
          %p437 = pneg %p301
        $region50: #{tpu_custom_call.1} parent=11 // pred_check_branch
          %439 = sbr.rel (%p437) target = $region52
        $region51: #{tpu_custom_call.1} parent=11 // pred_region
          _
        $region52: #{tpu_custom_call.1} parent=11 // pred_fallthru
          _
        // Predicated region
        $region53: #{tpu_custom_call.1} parent=11 // pred_check
          %p440 = pneg %p322
        $region54: #{tpu_custom_call.1} parent=11 // pred_check_branch
          %442 = sbr.rel (%p440) target = $region56
        $region55: #{tpu_custom_call.1} parent=11 // pred_region
          _
        $region56: #{tpu_custom_call.1} parent=11 // pred_fallthru
          _
        // Predicated region
        $region57: #{tpu_custom_call.1} parent=11 // pred_check
          %p443 = pneg %p343
        $region58: #{tpu_custom_call.1} parent=11 // pred_check_branch
          %445 = sbr.rel (%p443) target = $region60
        $region59: #{tpu_custom_call.1} parent=11 // pred_region
          _
        $region60: #{tpu_custom_call.1} parent=11 // pred_fallthru
          _
      $region12: #{tpu_custom_call.1} parent=5 // pred_fallthru
        _
      %p446 = scmp.lt.s32.totalorder %s25, 2
      // Predicated region
      $region61: #{tpu_custom_call.1} parent=5 // pred_check
        %p447 = pneg %p446
      $region62: #{tpu_custom_call.1} parent=5 // pred_check_branch
        %449 = sbr.rel (%p447) target = $region64
      $region63: #{tpu_custom_call.1} parent=5 // pred_region
        // Predicated region
        $region65: #{tpu_custom_call.1} parent=63 // pred_check
          %p450 = pneg %p59
        $region66: #{tpu_custom_call.1} parent=63 // pred_check_branch
          %452 = sbr.rel (%p450) target = $region68
        $region67: #{tpu_custom_call.1} parent=63 // pred_region
          %p453 = scmp.lt.s32.totalorder %s32, 1
          %s454 = scalar_select %p453, %s32, 1
          %p455 = scmp.lt.s32.totalorder %s33, 0
          %s456 = scalar_select %p455, %s33, 0
          %s457 = sadd.s32 %s456, %s454
          %s458 = smul.addr %s457, 8
          %s459 = scalar_lea.vmem %s0, %s458
        $region68: #{tpu_custom_call.1} parent=63 // pred_fallthru
          _
        // Predicated region
        $region69: #{tpu_custom_call.1} parent=63 // pred_check
          %p460 = pneg %p85
        $region70: #{tpu_custom_call.1} parent=63 // pred_check_branch
          %462 = sbr.rel (%p460) target = $region72
        $region71: #{tpu_custom_call.1} parent=63 // pred_region
          %p463 = scmp.lt.s32.totalorder %s32, 1
          %s464 = scalar_select %p463, %s32, 1
          %s465 = smul.addr %s464, 8
          %s466 = scalar_lea.vmem %s1, %s465
        $region72: #{tpu_custom_call.1} parent=63 // pred_fallthru
          _
      $region64: #{tpu_custom_call.1} parent=5 // pred_fallthru
        _
      %p467 = scmp.le.s32.totalorder 1, %s25
      %p468 = scmp.lt.s32.totalorder %s25, 3
      %p469 = pnand %p467, %p468
      %p470 = pneg %p469
      // Predicated region
      $region73: #{tpu_custom_call.1} parent=5 // pred_check
        _
      $region74: #{tpu_custom_call.1} parent=5 // pred_check_branch
        %472 = sbr.rel (%p469) target = $region76
      $region75: #{tpu_custom_call.1} parent=5 // pred_region
        %s473 = ssub.s32 %s25, 1
        // Predicated region
        $region77: #{tpu_custom_call.1} parent=75 // pred_check
          %p474 = pneg %p217
        $region78: #{tpu_custom_call.1} parent=75 // pred_check_branch
          %476 = sbr.rel (%p474) target = $region80
        $region79: #{tpu_custom_call.1} parent=75 // pred_region
          %477 = dma.done [#allocation3], 16
        $region80: #{tpu_custom_call.1} parent=75 // pred_fallthru
          _
        // Predicated region
        $region81: #{tpu_custom_call.1} parent=75 // pred_check
          %p478 = pneg %p238
        $region82: #{tpu_custom_call.1} parent=75 // pred_check_branch
          %480 = sbr.rel (%p478) target = $region84
        $region83: #{tpu_custom_call.1} parent=75 // pred_region
          %481 = dma.done [#allocation6], 16
        $region84: #{tpu_custom_call.1} parent=75 // pred_fallthru
          _
        // Predicated region
        $region85: #{tpu_custom_call.1} parent=75 // pred_check
          %p482 = pneg %p259
        $region86: #{tpu_custom_call.1} parent=75 // pred_check_branch
          %484 = sbr.rel (%p482) target = $region88
        $region87: #{tpu_custom_call.1} parent=75 // pred_region
          %485 = dma.done [#allocation6], 16
        $region88: #{tpu_custom_call.1} parent=75 // pred_fallthru
          _
        %p486 = scmp.lt.s32.totalorder %s34, 1
        %s487 = scalar_select %p486, %s34, 1
        %p488 = scmp.lt.s32.totalorder %s35, 0
        %s489 = scalar_select %p488, %s35, 0
        %s490 = sadd.s32 %s489, %s487
        %s491 = smul.addr %s490, 8
        %s492 = scalar_lea.vmem %s0, %s491
        %p493 = pneg %p65
        %p494 = pneg %p62
        %p495 = scmp.lt.s32.totalorder %s34, 1
        %s496 = scalar_select %p495, %s34, 1
        %s497 = smul.addr %s496, 8
        %s498 = scalar_lea.vmem %s1, %s497
        %p499 = pneg %p91
        %p500 = pneg %p88
        %p501 = pneg %p112
        %p502 = pneg %p109
        %p503 = pneg %p133
        %p504 = pneg %p130
        %p505 = pneg %p154
        %p506 = pneg %p151
        %p507 = pneg %p175
        %p508 = pneg %p172
        %p509 = pneg %p196
        %p510 = pneg %p193
        %p511 = pneg %p217
        %p512 = pneg %p214
        %p513 = pneg %p238
        %p514 = pneg %p235
        %p515 = pneg %p259
        %p516 = pneg %p256
        %p517 = pneg %p280
        %p518 = pneg %p277
        %p519 = pneg %p301
        %p520 = pneg %p298
        %p521 = pneg %p322
        %p522 = pneg %p319
        %p523 = pneg %p343
        %p524 = pneg %p340
        %p525 = pneg %p371
        %p526 = pneg %p368
        %s527 = sand.u32 %s358, 1
        %s528 = scalar_lea.sflag [#allocation4], %s527
        %s529 = sand.u32 %s358, 1
        %s530 = smul.addr %s529, 8
        %s531 = scalar_lea.vmem [#allocation8], %s530
        %p532 = scmp.lt.s32.totalorder %s34, 1
        %s533 = scalar_select %p532, %s34, 1
        %p534 = scmp.lt.s32.totalorder %s35, 0
        %s535 = scalar_select %p534, %s35, 0
        %s536 = sadd.s32 %s535, %s533
        %s537 = smul.addr %s536, 8
        %s538 = scalar_lea.vmem %s0, %s537
        %p539 = scmp.lt.s32.totalorder %s34, 1
        %s540 = scalar_select %p539, %s34, 1
        %s541 = smul.addr %s540, 8
        %s542 = scalar_lea.vmem %s1, %s541
        %v544 = vld [vmem:[%s538] sm:$0xff]
        %v545 = vld [vmem:[%s542] sm:$0xff]
        %v546 = vld [vmem:[%s2] sm:$0x1]
        %v547 = vld [vmem:[%s3] sm:$0x1]
        %vm548 = vcmask 261120
        %v549 = vsel %vm548, %v544, 0.0
        %550 = vadd.xlane.f32.xlu0 %v549
        %v551 = vpop.xlane.xlu0 %550
        %v552 = vrcp.pop 32.0
        %v553 = vmul.f32 %v551, %v552
        %v554 = vsub.f32 %v544, %v553
        %v555 = vmul.f32 %v554, %v554
        %v556 = vsel %vm548, %v555, 0.0
        %557 = vadd.xlane.f32.xlu0 %v556
        %v558 = vpop.xlane.xlu0 %557
        %v559 = vmul.f32 %v558, %v552
        %v560 = vadd.f32 %v559, 1e-05
        %v561 = vrsqrt.pop %v560
        %v562 = vmul.f32 %v554, %v561
        %v564 = vlaneseq
        %v565 = vshrl.u32 %v564, 7
        %v566 = vsub.s32 0, %v565
        %v567 = vrot.slane %v546, %v566
        %v569 = vmul.f32 %v562, %v567
        %v571 = vlaneseq
        %v572 = vshrl.u32 %v571, 7
        %v573 = vsub.s32 0, %v572
        %v574 = vrot.slane %v547, %v573
        %v576 = vadd.f32 %v569, %v574
        %v577 = vsel %vm548, %v545, 0.0
        %578 = vadd.xlane.f32.xlu0 %v577
        %v579 = vpop.xlane.xlu0 %578
        %v580 = vmul.f32 %v579, %v552
        %v581 = vsub.f32 %v545, %v580
        %v582 = vmul.f32 %v581, %v581
        %v583 = vsel %vm548, %v582, 0.0
        %584 = vadd.xlane.f32.xlu0 %v583
        %v585 = vpop.xlane.xlu0 %584
        %v586 = vmul.f32 %v585, %v552
        %v587 = vadd.f32 %v586, 1e-05
        %v588 = vrsqrt.pop %v587
        %v589 = vmul.f32 %v581, %v588
        %v590 = vmul.f32 %v589, %v567
        %v591 = vadd.f32 %v590, %v574
        %v592 = vpack.c.bf16 %v576, %v576
        %v593 = vld [vmem:[%s4] sm:$0xf]
        %v594 = vld [vmem:[%s4 + $0x4] sm:$0xf]
        %v595 = vld [vmem:[%s4 + $0x8] sm:$0xf]
        %v596 = vld [vmem:[%s4 + $0xc] sm:$0xf]
        %v601 = vunpack.c.l.b16 %v593
        %v602 = vunpack.c.l.b16 %v594
        %v603 = vunpack.c.l.b16 %v595
        %v604 = vunpack.c.l.b16 %v596
        %v605 = vpack.c.b16 %v602, %v601
        %v606 = vpack.c.b16 %v604, %v603
        %v610 = vsel %vm548, %v592, 0
        %612 = vmatprep.subr.bf16.mxu0 0
        %613 = vmatpush1.bf16.msra.mxu0 %v605
        %614 = vmatprep.subr.bf16.mxu0 0
        %615 = vmatpush1.bf16.msra.mxu0 %v606
        %616 = vmatprep.subr.bf16.mxu0 0
        %617 = vmatpush1.bf16.msra.mxu0 0
        %618 = vmatprep.subr.bf16.mxu0 0
        %619 = vmatpush1.bf16.msra.mxu0 0
        %620 = vmatprep.subr.bf16.mxu0 0
        %621 = vmatpush1.bf16.msra.mxu0 0
        %622 = vmatprep.subr.bf16.mxu0 0
        %623 = vmatpush1.bf16.msra.mxu0 0
        %624 = vmatprep.subr.bf16.mxu0 0
        %625 = vmatpush1.bf16.msra.mxu0 0
        %626 = vmatprep.subr.bf16.mxu0 0
        %627 = vmatpush1.bf16.msra.mxu0 0
        %628 = vmatprep.subr.bf16.mxu0 0
        %629 = vmatpush1.bf16.msra.mxu0 0
        %630 = vmatprep.subr.bf16.mxu0 0
        %631 = vmatpush1.bf16.msra.mxu0 0
        %632 = vmatprep.subr.bf16.mxu0 0
        %633 = vmatpush1.bf16.msra.mxu0 0
        %634 = vmatprep.subr.bf16.mxu0 0
        %635 = vmatpush1.bf16.msra.mxu0 0
        %636 = vmatprep.subr.bf16.mxu0 0
        %637 = vmatpush1.bf16.msra.mxu0 0
        %638 = vmatprep.subr.bf16.mxu0 0
        %639 = vmatpush1.bf16.msra.mxu0 0
        %640 = vmatprep.subr.bf16.mxu0 0
        %641 = vmatpush1.bf16.msra.mxu0 0
        %642 = vmatprep.subr.bf16.mxu0 0
        %643 = vmatpush1.bf16.msra.mxu0 0
        %644 = vmatprep.mubr.bf16.mxu0 0
        %645 = vmatmul.mubr.bf16.gmra.mrb[0].mxu0 %v610
        %v646 = vpop.f32.mrb[0].mxu0
        %v647 = vadd.f32 0.0, %v646
        %v648 = vpop.f32.mrb[0].mxu0
        %v649 = vpop.f32.mrb[0].mxu0
        %v650 = vpop.f32.mrb[0].mxu0
        %651 = vdwg.mxu0
        %v652 = vpack.c.bf16 %v591, %v591
        %v653 = vld [vmem:[%s5] sm:$0xf]
        %v654 = vld [vmem:[%s5 + $0x4] sm:$0xf]
        %v655 = vld [vmem:[%s5 + $0x8] sm:$0xf]
        %v656 = vld [vmem:[%s5 + $0xc] sm:$0xf]
        %v661 = vunpack.c.l.b16 %v653
        %v662 = vunpack.c.l.b16 %v654
        %v663 = vunpack.c.l.b16 %v655
        %v664 = vunpack.c.l.b16 %v656
        %v665 = vpack.c.b16 %v662, %v661
        %v666 = vpack.c.b16 %v664, %v663
        %v670 = vsel %vm548, %v652, 0
        %672 = vmatprep.subr.bf16.mxu0 0
        %673 = vmatpush1.bf16.msra.mxu0 %v665
        %674 = vmatprep.subr.bf16.mxu0 0
        %675 = vmatpush1.bf16.msra.mxu0 %v666
        %676 = vmatprep.subr.bf16.mxu0 0
        %677 = vmatpush1.bf16.msra.mxu0 0
        %678 = vmatprep.subr.bf16.mxu0 0
        %679 = vmatpush1.bf16.msra.mxu0 0
        %680 = vmatprep.subr.bf16.mxu0 0
        %681 = vmatpush1.bf16.msra.mxu0 0
        %682 = vmatprep.subr.bf16.mxu0 0
        %683 = vmatpush1.bf16.msra.mxu0 0
        %684 = vmatprep.subr.bf16.mxu0 0
        %685 = vmatpush1.bf16.msra.mxu0 0
        %686 = vmatprep.subr.bf16.mxu0 0
        %687 = vmatpush1.bf16.msra.mxu0 0
        %688 = vmatprep.subr.bf16.mxu0 0
        %689 = vmatpush1.bf16.msra.mxu0 0
        %690 = vmatprep.subr.bf16.mxu0 0
        %691 = vmatpush1.bf16.msra.mxu0 0
        %692 = vmatprep.subr.bf16.mxu0 0
        %693 = vmatpush1.bf16.msra.mxu0 0
        %694 = vmatprep.subr.bf16.mxu0 0
        %695 = vmatpush1.bf16.msra.mxu0 0
        %696 = vmatprep.subr.bf16.mxu0 0
        %697 = vmatpush1.bf16.msra.mxu0 0
        %698 = vmatprep.subr.bf16.mxu0 0
        %699 = vmatpush1.bf16.msra.mxu0 0
        %700 = vmatprep.subr.bf16.mxu0 0
        %701 = vmatpush1.bf16.msra.mxu0 0
        %702 = vmatprep.subr.bf16.mxu0 0
        %703 = vmatpush1.bf16.msra.mxu0 0
        %704 = vmatprep.mubr.bf16.mxu0 0
        %705 = vmatmul.mubr.bf16.gmra.mrb[0].mxu0 %v670
        %v706 = vpop.f32.mrb[0].mxu0
        %v707 = vadd.f32 0.0, %v706
        %v708 = vpop.f32.mrb[0].mxu0
        %v709 = vpop.f32.mrb[0].mxu0
        %v710 = vpop.f32.mrb[0].mxu0
        %711 = vdwg.mxu0
        %713 = vrot.lane.b32.xlu0 %v647, 120
        %v714 = vpop.permute.xlu0 %713
        %716 = vrot.lane.b32.xlu0 %v647, 112
        %v717 = vpop.permute.xlu0 %716
        %719 = vrot.lane.b32.xlu0 %v647, 104
        %v720 = vpop.permute.xlu0 %719
        %v722 = vcombine.low %v647, %v717
        %v723 = vcombine.high %v647, %v717
        %v725 = vunpack.c.l.s4 1983009808
        %v726 = vunpack.c.0.s8 %v725
        %v727 = vlaneseq
        %v728 = vshrl.u32 %v727, 7
        %v729 = vsub.s32 %v726, %v728
        %v730 = vrot.slane %v722, %v729
        %v732 = vunpack.c.l.s4 1983009808
        %v733 = vunpack.c.0.s8 %v732
        %v734 = vlaneseq
        %v735 = vshrl.u32 %v734, 7
        %v736 = vsub.s32 %v733, %v735
        %v737 = vrot.slane %v723, %v736
        %v738 = vcombine.low %v714, %v720
        %v739 = vcombine.high %v714, %v720
        %v741 = vunpack.c.l.s4 1983009808
        %v742 = vunpack.c.0.s8 %v741
        %v743 = vlaneseq
        %v744 = vshrl.u32 %v743, 7
        %v745 = vsub.s32 %v742, %v744
        %v746 = vrot.slane %v738, %v745
        %v748 = vunpack.c.l.s4 1983009808
        %v749 = vunpack.c.0.s8 %v748
        %v750 = vlaneseq
        %v751 = vshrl.u32 %v750, 7
        %v752 = vsub.s32 %v749, %v751
        %v753 = vrot.slane %v739, %v752
        %v754 = vcombine.low %v730, %v746
        %v755 = vcombine.high %v730, %v746
        %v757 = vunpack.c.l.s4 1934713408
        %v758 = vunpack.c.0.s8 %v757
        %v759 = vlaneseq
        %v760 = vshrl.u32 %v759, 7
        %v761 = vsub.s32 %v758, %v760
        %v762 = vrot.slane %v754, %v761
        %v764 = vunpack.c.l.s4 1934713408
        %v765 = vunpack.c.0.s8 %v764
        %v766 = vlaneseq
        %v767 = vshrl.u32 %v766, 7
        %v768 = vsub.s32 %v765, %v767
        %v769 = vrot.slane %v755, %v768
        %v770 = vcombine.low %v737, %v753
        %v771 = vcombine.high %v737, %v753
        %v773 = vunpack.c.l.s4 1934713408
        %v774 = vunpack.c.0.s8 %v773
        %v775 = vlaneseq
        %v776 = vshrl.u32 %v775, 7
        %v777 = vsub.s32 %v774, %v776
        %v778 = vrot.slane %v770, %v777
        %v780 = vunpack.c.l.s4 1934713408
        %v781 = vunpack.c.0.s8 %v780
        %v782 = vlaneseq
        %v783 = vshrl.u32 %v782, 7
        %v784 = vsub.s32 %v781, %v783
        %v785 = vrot.slane %v771, %v784
        %v786 = vcombine.high %v762, 0.0
        %v787 = vcombine.high %v769, 0.0
        %v788 = vcombine.high %v778, 0.0
        %v789 = vcombine.high %v785, 0.0
        %v790 = vcombine.low %v762, %v769
        %v792 = vunpack.c.l.s4 1983009808
        %v793 = vunpack.c.0.s8 %v792
        %v794 = vlaneseq
        %v795 = vshrl.u32 %v794, 7
        %v796 = vsub.s32 %v793, %v795
        %v797 = vrot.slane %v790, %v796
        %v798 = vcombine.low %v786, %v787
        %v800 = vunpack.c.l.s4 1983009808
        %v801 = vunpack.c.0.s8 %v800
        %v802 = vlaneseq
        %v803 = vshrl.u32 %v802, 7
        %v804 = vsub.s32 %v801, %v803
        %v805 = vrot.slane %v798, %v804
        %v806 = vcombine.low %v778, %v785
        %v808 = vunpack.c.l.s4 1983009808
        %v809 = vunpack.c.0.s8 %v808
        %v810 = vlaneseq
        %v811 = vshrl.u32 %v810, 7
        %v812 = vsub.s32 %v809, %v811
        %v813 = vrot.slane %v806, %v812
        %v814 = vcombine.low %v788, %v789
        %v816 = vunpack.c.l.s4 1983009808
        %v817 = vunpack.c.0.s8 %v816
        %v818 = vlaneseq
        %v819 = vshrl.u32 %v818, 7
        %v820 = vsub.s32 %v817, %v819
        %v821 = vrot.slane %v814, %v820
        %v822 = vcombine.low %v797, %v805
        %v823 = vcombine.high %v797, %v805
        %v825 = vunpack.c.l.s4 1934713408
        %v826 = vunpack.c.0.s8 %v825
        %v827 = vlaneseq
        %v828 = vshrl.u32 %v827, 7
        %v829 = vsub.s32 %v826, %v828
        %v830 = vrot.slane %v822, %v829
        %v832 = vunpack.c.l.s4 1934713408
        %v833 = vunpack.c.0.s8 %v832
        %v834 = vlaneseq
        %v835 = vshrl.u32 %v834, 7
        %v836 = vsub.s32 %v833, %v835
        %v837 = vrot.slane %v823, %v836
        %v838 = vcombine.low %v813, %v821
        %v839 = vcombine.high %v813, %v821
        %v841 = vunpack.c.l.s4 1934713408
        %v842 = vunpack.c.0.s8 %v841
        %v843 = vlaneseq
        %v844 = vshrl.u32 %v843, 7
        %v845 = vsub.s32 %v842, %v844
        %v846 = vrot.slane %v838, %v845
        %v848 = vunpack.c.l.s4 1934713408
        %v849 = vunpack.c.0.s8 %v848
        %v850 = vlaneseq
        %v851 = vshrl.u32 %v850, 7
        %v852 = vsub.s32 %v849, %v851
        %v853 = vrot.slane %v839, %v852
        %v854 = vcombine.low %v830, %v846
        %v855 = vcombine.high %v830, %v846
        %v856 = vcombine.low %v837, %v853
        %v857 = vcombine.high %v837, %v853
        %859 = vrot.lane.b32.xlu0 %v707, 120
        %v860 = vpop.permute.xlu0 %859
        %862 = vrot.lane.b32.xlu0 %v707, 112
        %v863 = vpop.permute.xlu0 %862
        %865 = vrot.lane.b32.xlu0 %v707, 104
        %v866 = vpop.permute.xlu0 %865
        %v868 = vcombine.low %v707, %v863
        %v869 = vcombine.high %v707, %v863
        %v871 = vunpack.c.l.s4 1983009808
        %v872 = vunpack.c.0.s8 %v871
        %v873 = vlaneseq
        %v874 = vshrl.u32 %v873, 7
        %v875 = vsub.s32 %v872, %v874
        %v876 = vrot.slane %v868, %v875
        %v878 = vunpack.c.l.s4 1983009808
        %v879 = vunpack.c.0.s8 %v878
        %v880 = vlaneseq
        %v881 = vshrl.u32 %v880, 7
        %v882 = vsub.s32 %v879, %v881
        %v883 = vrot.slane %v869, %v882
        %v884 = vcombine.low %v860, %v866
        %v885 = vcombine.high %v860, %v866
        %v887 = vunpack.c.l.s4 1983009808
        %v888 = vunpack.c.0.s8 %v887
        %v889 = vlaneseq
        %v890 = vshrl.u32 %v889, 7
        %v891 = vsub.s32 %v888, %v890
        %v892 = vrot.slane %v884, %v891
        %v894 = vunpack.c.l.s4 1983009808
        %v895 = vunpack.c.0.s8 %v894
        %v896 = vlaneseq
        %v897 = vshrl.u32 %v896, 7
        %v898 = vsub.s32 %v895, %v897
        %v899 = vrot.slane %v885, %v898
        %v900 = vcombine.low %v876, %v892
        %v901 = vcombine.high %v876, %v892
        %v903 = vunpack.c.l.s4 1934713408
        %v904 = vunpack.c.0.s8 %v903
        %v905 = vlaneseq
        %v906 = vshrl.u32 %v905, 7
        %v907 = vsub.s32 %v904, %v906
        %v908 = vrot.slane %v900, %v907
        %v910 = vunpack.c.l.s4 1934713408
        %v911 = vunpack.c.0.s8 %v910
        %v912 = vlaneseq
        %v913 = vshrl.u32 %v912, 7
        %v914 = vsub.s32 %v911, %v913
        %v915 = vrot.slane %v901, %v914
        %v916 = vcombine.low %v883, %v899
        %v917 = vcombine.high %v883, %v899
        %v919 = vunpack.c.l.s4 1934713408
        %v920 = vunpack.c.0.s8 %v919
        %v921 = vlaneseq
        %v922 = vshrl.u32 %v921, 7
        %v923 = vsub.s32 %v920, %v922
        %v924 = vrot.slane %v916, %v923
        %v926 = vunpack.c.l.s4 1934713408
        %v927 = vunpack.c.0.s8 %v926
        %v928 = vlaneseq
        %v929 = vshrl.u32 %v928, 7
        %v930 = vsub.s32 %v927, %v929
        %v931 = vrot.slane %v917, %v930
        %v932 = vcombine.high %v908, 0.0
        %v933 = vcombine.high %v915, 0.0
        %v934 = vcombine.high %v924, 0.0
        %v935 = vcombine.high %v931, 0.0
        %v936 = vcombine.low %v908, %v915
        %v938 = vunpack.c.l.s4 1983009808
        %v939 = vunpack.c.0.s8 %v938
        %v940 = vlaneseq
        %v941 = vshrl.u32 %v940, 7
        %v942 = vsub.s32 %v939, %v941
        %v943 = vrot.slane %v936, %v942
        %v944 = vcombine.low %v932, %v933
        %v946 = vunpack.c.l.s4 1983009808
        %v947 = vunpack.c.0.s8 %v946
        %v948 = vlaneseq
        %v949 = vshrl.u32 %v948, 7
        %v950 = vsub.s32 %v947, %v949
        %v951 = vrot.slane %v944, %v950
        %v952 = vcombine.low %v924, %v931
        %v954 = vunpack.c.l.s4 1983009808
        %v955 = vunpack.c.0.s8 %v954
        %v956 = vlaneseq
        %v957 = vshrl.u32 %v956, 7
        %v958 = vsub.s32 %v955, %v957
        %v959 = vrot.slane %v952, %v958
        %v960 = vcombine.low %v934, %v935
        %v962 = vunpack.c.l.s4 1983009808
        %v963 = vunpack.c.0.s8 %v962
        %v964 = vlaneseq
        %v965 = vshrl.u32 %v964, 7
        %v966 = vsub.s32 %v963, %v965
        %v967 = vrot.slane %v960, %v966
        %v968 = vcombine.low %v943, %v951
        %v969 = vcombine.high %v943, %v951
        %v971 = vunpack.c.l.s4 1934713408
        %v972 = vunpack.c.0.s8 %v971
        %v973 = vlaneseq
        %v974 = vshrl.u32 %v973, 7
        %v975 = vsub.s32 %v972, %v974
        %v976 = vrot.slane %v968, %v975
        %v978 = vunpack.c.l.s4 1934713408
        %v979 = vunpack.c.0.s8 %v978
        %v980 = vlaneseq
        %v981 = vshrl.u32 %v980, 7
        %v982 = vsub.s32 %v979, %v981
        %v983 = vrot.slane %v969, %v982
        %v984 = vcombine.low %v959, %v967
        %v985 = vcombine.high %v959, %v967
        %v987 = vunpack.c.l.s4 1934713408
        %v988 = vunpack.c.0.s8 %v987
        %v989 = vlaneseq
        %v990 = vshrl.u32 %v989, 7
        %v991 = vsub.s32 %v988, %v990
        %v992 = vrot.slane %v984, %v991
        %v994 = vunpack.c.l.s4 1934713408
        %v995 = vunpack.c.0.s8 %v994
        %v996 = vlaneseq
        %v997 = vshrl.u32 %v996, 7
        %v998 = vsub.s32 %v995, %v997
        %v999 = vrot.slane %v985, %v998
        %v1000 = vcombine.low %v976, %v992
        %v1001 = vcombine.high %v976, %v992
        %v1002 = vcombine.low %v983, %v999
        %v1003 = vcombine.high %v983, %v999
        %1004 = vrot.lane.b32.xlu0 %v707, 96
        %v1005 = vpop.permute.xlu0 %1004
        %1006 = vrot.lane.b32.xlu0 %v860, 96
        %v1007 = vpop.permute.xlu0 %1006
        %1008 = vrot.lane.b32.xlu0 %v863, 96
        %v1009 = vpop.permute.xlu0 %1008
        %1010 = vrot.lane.b32.xlu0 %v866, 96
        %v1011 = vpop.permute.xlu0 %1010
        %v1016 = vcombine.low %v1005, %v1009
        %v1017 = vcombine.high %v1005, %v1009
        %v1019 = vunpack.c.l.s4 1983009808
        %v1020 = vunpack.c.0.s8 %v1019
        %v1021 = vlaneseq
        %v1022 = vshrl.u32 %v1021, 7
        %v1023 = vsub.s32 %v1020, %v1022
        %v1024 = vrot.slane %v1016, %v1023
        %v1026 = vunpack.c.l.s4 1983009808
        %v1027 = vunpack.c.0.s8 %v1026
        %v1028 = vlaneseq
        %v1029 = vshrl.u32 %v1028, 7
        %v1030 = vsub.s32 %v1027, %v1029
        %v1031 = vrot.slane %v1017, %v1030
        %v1032 = vcombine.low %v1007, %v1011
        %v1033 = vcombine.high %v1007, %v1011
        %v1035 = vunpack.c.l.s4 1983009808
        %v1036 = vunpack.c.0.s8 %v1035
        %v1037 = vlaneseq
        %v1038 = vshrl.u32 %v1037, 7
        %v1039 = vsub.s32 %v1036, %v1038
        %v1040 = vrot.slane %v1032, %v1039
        %v1042 = vunpack.c.l.s4 1983009808
        %v1043 = vunpack.c.0.s8 %v1042
        %v1044 = vlaneseq
        %v1045 = vshrl.u32 %v1044, 7
        %v1046 = vsub.s32 %v1043, %v1045
        %v1047 = vrot.slane %v1033, %v1046
        %v1048 = vcombine.low %v1024, %v1040
        %v1049 = vcombine.high %v1024, %v1040
        %v1051 = vunpack.c.l.s4 1934713408
        %v1052 = vunpack.c.0.s8 %v1051
        %v1053 = vlaneseq
        %v1054 = vshrl.u32 %v1053, 7
        %v1055 = vsub.s32 %v1052, %v1054
        %v1056 = vrot.slane %v1048, %v1055
        %v1058 = vunpack.c.l.s4 1934713408
        %v1059 = vunpack.c.0.s8 %v1058
        %v1060 = vlaneseq
        %v1061 = vshrl.u32 %v1060, 7
        %v1062 = vsub.s32 %v1059, %v1061
        %v1063 = vrot.slane %v1049, %v1062
        %v1064 = vcombine.low %v1031, %v1047
        %v1065 = vcombine.high %v1031, %v1047
        %v1067 = vunpack.c.l.s4 1934713408
        %v1068 = vunpack.c.0.s8 %v1067
        %v1069 = vlaneseq
        %v1070 = vshrl.u32 %v1069, 7
        %v1071 = vsub.s32 %v1068, %v1070
        %v1072 = vrot.slane %v1064, %v1071
        %v1074 = vunpack.c.l.s4 1934713408
        %v1075 = vunpack.c.0.s8 %v1074
        %v1076 = vlaneseq
        %v1077 = vshrl.u32 %v1076, 7
        %v1078 = vsub.s32 %v1075, %v1077
        %v1079 = vrot.slane %v1065, %v1078
        %v1080 = vcombine.high %v1056, 0.0
        %v1081 = vcombine.high %v1063, 0.0
        %v1082 = vcombine.high %v1072, 0.0
        %v1083 = vcombine.high %v1079, 0.0
        %v1084 = vcombine.low %v1056, %v1063
        %v1086 = vunpack.c.l.s4 1983009808
        %v1087 = vunpack.c.0.s8 %v1086
        %v1088 = vlaneseq
        %v1089 = vshrl.u32 %v1088, 7
        %v1090 = vsub.s32 %v1087, %v1089
        %v1091 = vrot.slane %v1084, %v1090
        %v1092 = vcombine.low %v1080, %v1081
        %v1094 = vunpack.c.l.s4 1983009808
        %v1095 = vunpack.c.0.s8 %v1094
        %v1096 = vlaneseq
        %v1097 = vshrl.u32 %v1096, 7
        %v1098 = vsub.s32 %v1095, %v1097
        %v1099 = vrot.slane %v1092, %v1098
        %v1100 = vcombine.low %v1072, %v1079
        %v1102 = vunpack.c.l.s4 1983009808
        %v1103 = vunpack.c.0.s8 %v1102
        %v1104 = vlaneseq
        %v1105 = vshrl.u32 %v1104, 7
        %v1106 = vsub.s32 %v1103, %v1105
        %v1107 = vrot.slane %v1100, %v1106
        %v1108 = vcombine.low %v1082, %v1083
        %v1110 = vunpack.c.l.s4 1983009808
        %v1111 = vunpack.c.0.s8 %v1110
        %v1112 = vlaneseq
        %v1113 = vshrl.u32 %v1112, 7
        %v1114 = vsub.s32 %v1111, %v1113
        %v1115 = vrot.slane %v1108, %v1114
        %v1116 = vcombine.low %v1091, %v1099
        %v1117 = vcombine.high %v1091, %v1099
        %v1119 = vunpack.c.l.s4 1934713408
        %v1120 = vunpack.c.0.s8 %v1119
        %v1121 = vlaneseq
        %v1122 = vshrl.u32 %v1121, 7
        %v1123 = vsub.s32 %v1120, %v1122
        %v1124 = vrot.slane %v1116, %v1123
        %v1126 = vunpack.c.l.s4 1934713408
        %v1127 = vunpack.c.0.s8 %v1126
        %v1128 = vlaneseq
        %v1129 = vshrl.u32 %v1128, 7
        %v1130 = vsub.s32 %v1127, %v1129
        %v1131 = vrot.slane %v1117, %v1130
        %v1132 = vcombine.low %v1107, %v1115
        %v1133 = vcombine.high %v1107, %v1115
        %v1135 = vunpack.c.l.s4 1934713408
        %v1136 = vunpack.c.0.s8 %v1135
        %v1137 = vlaneseq
        %v1138 = vshrl.u32 %v1137, 7
        %v1139 = vsub.s32 %v1136, %v1138
        %v1140 = vrot.slane %v1132, %v1139
        %v1142 = vunpack.c.l.s4 1934713408
        %v1143 = vunpack.c.0.s8 %v1142
        %v1144 = vlaneseq
        %v1145 = vshrl.u32 %v1144, 7
        %v1146 = vsub.s32 %v1143, %v1145
        %v1147 = vrot.slane %v1133, %v1146
        %v1148 = vcombine.low %v1124, %v1140
        %v1149 = vcombine.high %v1124, %v1140
        %v1150 = vcombine.low %v1131, %v1147
        %v1151 = vcombine.high %v1131, %v1147
        %v1152 = vpack.c.bf16 %v854, %v854
        %v1153 = vpack.c.bf16 %v855, %v855
        %v1154 = vpack.c.bf16 %v856, %v856
        %v1155 = vpack.c.bf16 %v857, %v857
        %v1156 = vpack.c.bf16 %v1000, %v1000
        %v1157 = vpack.c.bf16 %v1001, %v1001
        %v1158 = vpack.c.bf16 %v1002, %v1002
        %v1159 = vpack.c.bf16 %v1003, %v1003
        %vm1160 = vcmask 64512
        %v1162 = vsel %vm1160, %v1152, 0
        %v1165 = vsel %vm1160, %v1156, 0
        %1167 = vmatprep.subr.bf16.mxu0 0
        %1168 = vmatpush1.bf16.xpose.msra.mxu0 %v1165
        %1169 = vmatprep.subr.bf16.mxu0 0
        %1170 = vmatpush1.bf16.xpose.msra.mxu0 0
        %1171 = vmatprep.subr.bf16.mxu0 0
        %1172 = vmatpush1.bf16.xpose.msra.mxu0 0
        %1173 = vmatprep.subr.bf16.mxu0 0
        %1174 = vmatpush1.bf16.xpose.msra.mxu0 0
        %1175 = vmatprep.subr.bf16.mxu0 0
        %1176 = vmatpush1.bf16.xpose.msra.mxu0 0
        %1177 = vmatprep.subr.bf16.mxu0 0
        %1178 = vmatpush1.bf16.xpose.msra.mxu0 0
        %1179 = vmatprep.subr.bf16.mxu0 0
        %1180 = vmatpush1.bf16.xpose.msra.mxu0 0
        %1181 = vmatprep.subr.bf16.mxu0 0
        %1182 = vmatpush1.bf16.xpose.msra.mxu0 0
        %1183 = vmatprep.subr.bf16.mxu0 0
        %1184 = vmatpush1.bf16.xpose.msra.mxu0 0
        %1185 = vmatprep.subr.bf16.mxu0 0
        %1186 = vmatpush1.bf16.xpose.msra.mxu0 0
        %1187 = vmatprep.subr.bf16.mxu0 0
        %1188 = vmatpush1.bf16.xpose.msra.mxu0 0
        %1189 = vmatprep.subr.bf16.mxu0 0
        %1190 = vmatpush1.bf16.xpose.msra.mxu0 0
        %1191 = vmatprep.subr.bf16.mxu0 0
        %1192 = vmatpush1.bf16.xpose.msra.mxu0 0
        %1193 = vmatprep.subr.bf16.mxu0 0
        %1194 = vmatpush1.bf16.xpose.msra.mxu0 0
        %1195 = vmatprep.subr.bf16.mxu0 0
        %1196 = vmatpush1.bf16.xpose.msra.mxu0 0
        %1197 = vmatprep.subr.bf16.mxu0 0
        %1198 = vmatpush1.bf16.xpose.msra.mxu0 0
        %1199 = vmatprep.mubr.bf16.mxu0 0
        %1200 = vmatmul.mubr.bf16.gmra.mrb[0].mxu0 %v1162
        %v1201 = vpop.f32.mrb[0].mxu0
        %v1202 = vadd.f32 0.0, %v1201
        %v1203 = vpop.f32.mrb[0].mxu0
        %v1204 = vpop.f32.mrb[0].mxu0
        %v1205 = vpop.f32.mrb[0].mxu0
        %1206 = vdwg.mxu0
        %v1208 = vsel %vm1160, %v1153, 0
        %v1211 = vsel %vm1160, %v1157, 0
        %1213 = vmatprep.subr.bf16.mxu0 0
        %1214 = vmatpush1.bf16.xpose.msra.mxu0 %v1211
        %1215 = vmatprep.subr.bf16.mxu0 0
        %1216 = vmatpush1.bf16.xpose.msra.mxu0 0
        %1217 = vmatprep.subr.bf16.mxu0 0
        %1218 = vmatpush1.bf16.xpose.msra.mxu0 0
        %1219 = vmatprep.subr.bf16.mxu0 0
        %1220 = vmatpush1.bf16.xpose.msra.mxu0 0
        %1221 = vmatprep.subr.bf16.mxu0 0
        %1222 = vmatpush1.bf16.xpose.msra.mxu0 0
        %1223 = vmatprep.subr.bf16.mxu0 0
        %1224 = vmatpush1.bf16.xpose.msra.mxu0 0
        %1225 = vmatprep.subr.bf16.mxu0 0
        %1226 = vmatpush1.bf16.xpose.msra.mxu0 0
        %1227 = vmatprep.subr.bf16.mxu0 0
        %1228 = vmatpush1.bf16.xpose.msra.mxu0 0
        %1229 = vmatprep.subr.bf16.mxu0 0
        %1230 = vmatpush1.bf16.xpose.msra.mxu0 0
        %1231 = vmatprep.subr.bf16.mxu0 0
        %1232 = vmatpush1.bf16.xpose.msra.mxu0 0
        %1233 = vmatprep.subr.bf16.mxu0 0
        %1234 = vmatpush1.bf16.xpose.msra.mxu0 0
        %1235 = vmatprep.subr.bf16.mxu0 0
        %1236 = vmatpush1.bf16.xpose.msra.mxu0 0
        %1237 = vmatprep.subr.bf16.mxu0 0
        %1238 = vmatpush1.bf16.xpose.msra.mxu0 0
        %1239 = vmatprep.subr.bf16.mxu0 0
        %1240 = vmatpush1.bf16.xpose.msra.mxu0 0
        %1241 = vmatprep.subr.bf16.mxu0 0
        %1242 = vmatpush1.bf16.xpose.msra.mxu0 0
        %1243 = vmatprep.subr.bf16.mxu0 0
        %1244 = vmatpush1.bf16.xpose.msra.mxu0 0
        %1245 = vmatprep.mubr.bf16.mxu0 0
        %1246 = vmatmul.mubr.bf16.gmra.mrb[0].mxu0 %v1208
        %v1247 = vpop.f32.mrb[0].mxu0
        %v1248 = vadd.f32 0.0, %v1247
        %v1249 = vpop.f32.mrb[0].mxu0
        %v1250 = vpop.f32.mrb[0].mxu0
        %v1251 = vpop.f32.mrb[0].mxu0
        %1252 = vdwg.mxu0
        %v1254 = vsel %vm1160, %v1154, 0
        %v1257 = vsel %vm1160, %v1158, 0
        %1259 = vmatprep.subr.bf16.mxu0 0
        %1260 = vmatpush1.bf16.xpose.msra.mxu0 %v1257
        %1261 = vmatprep.subr.bf16.mxu0 0
        %1262 = vmatpush1.bf16.xpose.msra.mxu0 0
        %1263 = vmatprep.subr.bf16.mxu0 0
        %1264 = vmatpush1.bf16.xpose.msra.mxu0 0
        %1265 = vmatprep.subr.bf16.mxu0 0
        %1266 = vmatpush1.bf16.xpose.msra.mxu0 0
        %1267 = vmatprep.subr.bf16.mxu0 0
        %1268 = vmatpush1.bf16.xpose.msra.mxu0 0
        %1269 = vmatprep.subr.bf16.mxu0 0
        %1270 = vmatpush1.bf16.xpose.msra.mxu0 0
        %1271 = vmatprep.subr.bf16.mxu0 0
        %1272 = vmatpush1.bf16.xpose.msra.mxu0 0
        %1273 = vmatprep.subr.bf16.mxu0 0
        %1274 = vmatpush1.bf16.xpose.msra.mxu0 0
        %1275 = vmatprep.subr.bf16.mxu0 0
        %1276 = vmatpush1.bf16.xpose.msra.mxu0 0
        %1277 = vmatprep.subr.bf16.mxu0 0
        %1278 = vmatpush1.bf16.xpose.msra.mxu0 0
        %1279 = vmatprep.subr.bf16.mxu0 0
        %1280 = vmatpush1.bf16.xpose.msra.mxu0 0
        %1281 = vmatprep.subr.bf16.mxu0 0
        %1282 = vmatpush1.bf16.xpose.msra.mxu0 0
        %1283 = vmatprep.subr.bf16.mxu0 0
        %1284 = vmatpush1.bf16.xpose.msra.mxu0 0
        %1285 = vmatprep.subr.bf16.mxu0 0
        %1286 = vmatpush1.bf16.xpose.msra.mxu0 0
        %1287 = vmatprep.subr.bf16.mxu0 0
        %1288 = vmatpush1.bf16.xpose.msra.mxu0 0
        %1289 = vmatprep.subr.bf16.mxu0 0
        %1290 = vmatpush1.bf16.xpose.msra.mxu0 0
        %1291 = vmatprep.mubr.bf16.mxu0 0
        %1292 = vmatmul.mubr.bf16.gmra.mrb[0].mxu0 %v1254
        %v1293 = vpop.f32.mrb[0].mxu0
        %v1294 = vadd.f32 0.0, %v1293
        %v1295 = vpop.f32.mrb[0].mxu0
        %v1296 = vpop.f32.mrb[0].mxu0
        %v1297 = vpop.f32.mrb[0].mxu0
        %1298 = vdwg.mxu0
        %v1300 = vsel %vm1160, %v1155, 0
        %v1303 = vsel %vm1160, %v1159, 0
        %1305 = vmatprep.subr.bf16.mxu0 0
        %1306 = vmatpush1.bf16.xpose.msra.mxu0 %v1303
        %1307 = vmatprep.subr.bf16.mxu0 0
        %1308 = vmatpush1.bf16.xpose.msra.mxu0 0
        %1309 = vmatprep.subr.bf16.mxu0 0
        %1310 = vmatpush1.bf16.xpose.msra.mxu0 0
        %1311 = vmatprep.subr.bf16.mxu0 0
        %1312 = vmatpush1.bf16.xpose.msra.mxu0 0
        %1313 = vmatprep.subr.bf16.mxu0 0
        %1314 = vmatpush1.bf16.xpose.msra.mxu0 0
        %1315 = vmatprep.subr.bf16.mxu0 0
        %1316 = vmatpush1.bf16.xpose.msra.mxu0 0
        %1317 = vmatprep.subr.bf16.mxu0 0
        %1318 = vmatpush1.bf16.xpose.msra.mxu0 0
        %1319 = vmatprep.subr.bf16.mxu0 0
        %1320 = vmatpush1.bf16.xpose.msra.mxu0 0
        %1321 = vmatprep.subr.bf16.mxu0 0
        %1322 = vmatpush1.bf16.xpose.msra.mxu0 0
        %1323 = vmatprep.subr.bf16.mxu0 0
        %1324 = vmatpush1.bf16.xpose.msra.mxu0 0
        %1325 = vmatprep.subr.bf16.mxu0 0
        %1326 = vmatpush1.bf16.xpose.msra.mxu0 0
        %1327 = vmatprep.subr.bf16.mxu0 0
        %1328 = vmatpush1.bf16.xpose.msra.mxu0 0
        %1329 = vmatprep.subr.bf16.mxu0 0
        %1330 = vmatpush1.bf16.xpose.msra.mxu0 0
        %1331 = vmatprep.subr.bf16.mxu0 0
        %1332 = vmatpush1.bf16.xpose.msra.mxu0 0
        %1333 = vmatprep.subr.bf16.mxu0 0
        %1334 = vmatpush1.bf16.xpose.msra.mxu0 0
        %1335 = vmatprep.subr.bf16.mxu0 0
        %1336 = vmatpush1.bf16.xpose.msra.mxu0 0
        %1337 = vmatprep.mubr.bf16.mxu0 0
        %1338 = vmatmul.mubr.bf16.gmra.mrb[0].mxu0 %v1300
        %v1339 = vpop.f32.mrb[0].mxu0
        %v1340 = vadd.f32 0.0, %v1339
        %v1341 = vpop.f32.mrb[0].mxu0
        %v1342 = vpop.f32.mrb[0].mxu0
        %v1343 = vpop.f32.mrb[0].mxu0
        %1344 = vdwg.mxu0
        %v1345 = vmul.f32 %v1202, 0.35355338
        %v1346 = vmul.f32 %v1248, 0.35355338
        %v1347 = vmul.f32 %v1294, 0.35355338
        %v1348 = vmul.f32 %v1340, 0.35355338
        %v1349 = vsel %vm1160, %v1345, -inf
        %1350 = vmax.xlane.f32.xlu0 %v1349
        %v1351 = vpop.xlane.xlu0 %1350
        %v1352 = vsel %vm1160, %v1346, -inf
        %1353 = vmax.xlane.f32.xlu0 %v1352
        %v1354 = vpop.xlane.xlu0 %1353
        %v1355 = vsel %vm1160, %v1347, -inf
        %1356 = vmax.xlane.f32.xlu0 %v1355
        %v1357 = vpop.xlane.xlu0 %1356
        %v1358 = vsel %vm1160, %v1348, -inf
        %1359 = vmax.xlane.f32.xlu0 %v1358
        %v1360 = vpop.xlane.xlu0 %1359
        %v1361 = vsub.f32 %v1345, %v1351
        %v1362 = vsub.f32 %v1346, %v1354
        %v1363 = vsub.f32 %v1347, %v1357
        %v1364 = vsub.f32 %v1348, %v1360
        %v1365 = vmul.f32 %v1361, 1.442695
        %v1366 = vpow.pop %v1365
        %v1367 = vmul.f32 %v1362, 1.442695
        %v1368 = vpow.pop %v1367
        %v1369 = vmul.f32 %v1363, 1.442695
        %v1370 = vpow.pop %v1369
        %v1371 = vmul.f32 %v1364, 1.442695
        %v1372 = vpow.pop %v1371
        %v1373 = vsel %vm1160, %v1366, 0.0
        %1374 = vadd.xlane.f32.xlu0 %v1373
        %v1375 = vpop.xlane.xlu0 %1374
        %v1376 = vsel %vm1160, %v1368, 0.0
        %1377 = vadd.xlane.f32.xlu0 %v1376
        %v1378 = vpop.xlane.xlu0 %1377
        %v1379 = vsel %vm1160, %v1370, 0.0
        %1380 = vadd.xlane.f32.xlu0 %v1379
        %v1381 = vpop.xlane.xlu0 %1380
        %v1382 = vsel %vm1160, %v1372, 0.0
        %1383 = vadd.xlane.f32.xlu0 %v1382
        %v1384 = vpop.xlane.xlu0 %1383
        %v1385 = vrcp.pop %v1375
        %v1386 = vrcp.pop %v1378
        %v1387 = vrcp.pop %v1381
        %v1388 = vrcp.pop %v1384
        %v1389 = vmul.f32 %v1366, %v1385
        %v1390 = vmul.f32 %v1368, %v1386
        %v1391 = vmul.f32 %v1370, %v1387
        %v1392 = vmul.f32 %v1372, %v1388
        %v1393 = vpack.c.bf16 %v1389, %v1389
        %v1394 = vpack.c.bf16 %v1390, %v1390
        %v1395 = vpack.c.bf16 %v1391, %v1391
        %v1396 = vpack.c.bf16 %v1392, %v1392
        %v1397 = vpack.c.bf16 %v1148, %v1148
        %v1398 = vpack.c.bf16 %v1149, %v1149
        %v1399 = vpack.c.bf16 %v1150, %v1150
        %v1400 = vpack.c.bf16 %v1151, %v1151
        %v1402 = vsel %vm1160, %v1393, 0
        %vm1404 = vcmask 1043456
        %v1406 = vsel %vm1404, %v1397, 0
        %1408 = vmatprep.subr.bf16.mxu0 0
        %1409 = vmatpush1.bf16.msra.mxu0 %v1406
        %1410 = vmatprep.subr.bf16.mxu0 0
        %1411 = vmatpush1.bf16.msra.mxu0 0
        %1412 = vmatprep.subr.bf16.mxu0 0
        %1413 = vmatpush1.bf16.msra.mxu0 0
        %1414 = vmatprep.subr.bf16.mxu0 0
        %1415 = vmatpush1.bf16.msra.mxu0 0
        %1416 = vmatprep.subr.bf16.mxu0 0
        %1417 = vmatpush1.bf16.msra.mxu0 0
        %1418 = vmatprep.subr.bf16.mxu0 0
        %1419 = vmatpush1.bf16.msra.mxu0 0
        %1420 = vmatprep.subr.bf16.mxu0 0
        %1421 = vmatpush1.bf16.msra.mxu0 0
        %1422 = vmatprep.subr.bf16.mxu0 0
        %1423 = vmatpush1.bf16.msra.mxu0 0
        %1424 = vmatprep.subr.bf16.mxu0 0
        %1425 = vmatpush1.bf16.msra.mxu0 0
        %1426 = vmatprep.subr.bf16.mxu0 0
        %1427 = vmatpush1.bf16.msra.mxu0 0
        %1428 = vmatprep.subr.bf16.mxu0 0
        %1429 = vmatpush1.bf16.msra.mxu0 0
        %1430 = vmatprep.subr.bf16.mxu0 0
        %1431 = vmatpush1.bf16.msra.mxu0 0
        %1432 = vmatprep.subr.bf16.mxu0 0
        %1433 = vmatpush1.bf16.msra.mxu0 0
        %1434 = vmatprep.subr.bf16.mxu0 0
        %1435 = vmatpush1.bf16.msra.mxu0 0
        %1436 = vmatprep.subr.bf16.mxu0 0
        %1437 = vmatpush1.bf16.msra.mxu0 0
        %1438 = vmatprep.subr.bf16.mxu0 0
        %1439 = vmatpush1.bf16.msra.mxu0 0
        %1440 = vmatprep.mubr.bf16.mxu0 0
        %1441 = vmatmul.mubr.bf16.gmra.mrb[0].mxu0 %v1402
        %v1442 = vpop.f32.mrb[0].mxu0
        %v1443 = vadd.f32 0.0, %v1442
        %v1444 = vpop.f32.mrb[0].mxu0
        %v1445 = vpop.f32.mrb[0].mxu0
        %v1446 = vpop.f32.mrb[0].mxu0
        %1447 = vdwg.mxu0
        %v1449 = vsel %vm1160, %v1394, 0
        %v1452 = vsel %vm1404, %v1398, 0
        %1454 = vmatprep.subr.bf16.mxu0 0
        %1455 = vmatpush1.bf16.msra.mxu0 %v1452
        %1456 = vmatprep.subr.bf16.mxu0 0
        %1457 = vmatpush1.bf16.msra.mxu0 0
        %1458 = vmatprep.subr.bf16.mxu0 0
        %1459 = vmatpush1.bf16.msra.mxu0 0
        %1460 = vmatprep.subr.bf16.mxu0 0
        %1461 = vmatpush1.bf16.msra.mxu0 0
        %1462 = vmatprep.subr.bf16.mxu0 0
        %1463 = vmatpush1.bf16.msra.mxu0 0
        %1464 = vmatprep.subr.bf16.mxu0 0
        %1465 = vmatpush1.bf16.msra.mxu0 0
        %1466 = vmatprep.subr.bf16.mxu0 0
        %1467 = vmatpush1.bf16.msra.mxu0 0
        %1468 = vmatprep.subr.bf16.mxu0 0
        %1469 = vmatpush1.bf16.msra.mxu0 0
        %1470 = vmatprep.subr.bf16.mxu0 0
        %1471 = vmatpush1.bf16.msra.mxu0 0
        %1472 = vmatprep.subr.bf16.mxu0 0
        %1473 = vmatpush1.bf16.msra.mxu0 0
        %1474 = vmatprep.subr.bf16.mxu0 0
        %1475 = vmatpush1.bf16.msra.mxu0 0
        %1476 = vmatprep.subr.bf16.mxu0 0
        %1477 = vmatpush1.bf16.msra.mxu0 0
        %1478 = vmatprep.subr.bf16.mxu0 0
        %1479 = vmatpush1.bf16.msra.mxu0 0
        %1480 = vmatprep.subr.bf16.mxu0 0
        %1481 = vmatpush1.bf16.msra.mxu0 0
        %1482 = vmatprep.subr.bf16.mxu0 0
        %1483 = vmatpush1.bf16.msra.mxu0 0
        %1484 = vmatprep.subr.bf16.mxu0 0
        %1485 = vmatpush1.bf16.msra.mxu0 0
        %1486 = vmatprep.mubr.bf16.mxu0 0
        %1487 = vmatmul.mubr.bf16.gmra.mrb[0].mxu0 %v1449
        %v1488 = vpop.f32.mrb[0].mxu0
        %v1489 = vadd.f32 0.0, %v1488
        %v1490 = vpop.f32.mrb[0].mxu0
        %v1491 = vpop.f32.mrb[0].mxu0
        %v1492 = vpop.f32.mrb[0].mxu0
        %1493 = vdwg.mxu0
        %v1495 = vsel %vm1160, %v1395, 0
        %v1498 = vsel %vm1404, %v1399, 0
        %1500 = vmatprep.subr.bf16.mxu0 0
        %1501 = vmatpush1.bf16.msra.mxu0 %v1498
        %1502 = vmatprep.subr.bf16.mxu0 0
        %1503 = vmatpush1.bf16.msra.mxu0 0
        %1504 = vmatprep.subr.bf16.mxu0 0
        %1505 = vmatpush1.bf16.msra.mxu0 0
        %1506 = vmatprep.subr.bf16.mxu0 0
        %1507 = vmatpush1.bf16.msra.mxu0 0
        %1508 = vmatprep.subr.bf16.mxu0 0
        %1509 = vmatpush1.bf16.msra.mxu0 0
        %1510 = vmatprep.subr.bf16.mxu0 0
        %1511 = vmatpush1.bf16.msra.mxu0 0
        %1512 = vmatprep.subr.bf16.mxu0 0
        %1513 = vmatpush1.bf16.msra.mxu0 0
        %1514 = vmatprep.subr.bf16.mxu0 0
        %1515 = vmatpush1.bf16.msra.mxu0 0
        %1516 = vmatprep.subr.bf16.mxu0 0
        %1517 = vmatpush1.bf16.msra.mxu0 0
        %1518 = vmatprep.subr.bf16.mxu0 0
        %1519 = vmatpush1.bf16.msra.mxu0 0
        %1520 = vmatprep.subr.bf16.mxu0 0
        %1521 = vmatpush1.bf16.msra.mxu0 0
        %1522 = vmatprep.subr.bf16.mxu0 0
        %1523 = vmatpush1.bf16.msra.mxu0 0
        %1524 = vmatprep.subr.bf16.mxu0 0
        %1525 = vmatpush1.bf16.msra.mxu0 0
        %1526 = vmatprep.subr.bf16.mxu0 0
        %1527 = vmatpush1.bf16.msra.mxu0 0
        %1528 = vmatprep.subr.bf16.mxu0 0
        %1529 = vmatpush1.bf16.msra.mxu0 0
        %1530 = vmatprep.subr.bf16.mxu0 0
        %1531 = vmatpush1.bf16.msra.mxu0 0
        %1532 = vmatprep.mubr.bf16.mxu0 0
        %1533 = vmatmul.mubr.bf16.gmra.mrb[0].mxu0 %v1495
        %v1534 = vpop.f32.mrb[0].mxu0
        %v1535 = vadd.f32 0.0, %v1534
        %v1536 = vpop.f32.mrb[0].mxu0
        %v1537 = vpop.f32.mrb[0].mxu0
        %v1538 = vpop.f32.mrb[0].mxu0
        %1539 = vdwg.mxu0
        %v1541 = vsel %vm1160, %v1396, 0
        %v1544 = vsel %vm1404, %v1400, 0
        %1546 = vmatprep.subr.bf16.mxu0 0
        %1547 = vmatpush1.bf16.msra.mxu0 %v1544
        %1548 = vmatprep.subr.bf16.mxu0 0
        %1549 = vmatpush1.bf16.msra.mxu0 0
        %1550 = vmatprep.subr.bf16.mxu0 0
        %1551 = vmatpush1.bf16.msra.mxu0 0
        %1552 = vmatprep.subr.bf16.mxu0 0
        %1553 = vmatpush1.bf16.msra.mxu0 0
        %1554 = vmatprep.subr.bf16.mxu0 0
        %1555 = vmatpush1.bf16.msra.mxu0 0
        %1556 = vmatprep.subr.bf16.mxu0 0
        %1557 = vmatpush1.bf16.msra.mxu0 0
        %1558 = vmatprep.subr.bf16.mxu0 0
        %1559 = vmatpush1.bf16.msra.mxu0 0
        %1560 = vmatprep.subr.bf16.mxu0 0
        %1561 = vmatpush1.bf16.msra.mxu0 0
        %1562 = vmatprep.subr.bf16.mxu0 0
        %1563 = vmatpush1.bf16.msra.mxu0 0
        %1564 = vmatprep.subr.bf16.mxu0 0
        %1565 = vmatpush1.bf16.msra.mxu0 0
        %1566 = vmatprep.subr.bf16.mxu0 0
        %1567 = vmatpush1.bf16.msra.mxu0 0
        %1568 = vmatprep.subr.bf16.mxu0 0
        %1569 = vmatpush1.bf16.msra.mxu0 0
        %1570 = vmatprep.subr.bf16.mxu0 0
        %1571 = vmatpush1.bf16.msra.mxu0 0
        %1572 = vmatprep.subr.bf16.mxu0 0
        %1573 = vmatpush1.bf16.msra.mxu0 0
        %1574 = vmatprep.subr.bf16.mxu0 0
        %1575 = vmatpush1.bf16.msra.mxu0 0
        %1576 = vmatprep.subr.bf16.mxu0 0
        %1577 = vmatpush1.bf16.msra.mxu0 0
        %1578 = vmatprep.mubr.bf16.mxu0 0
        %1579 = vmatmul.mubr.bf16.gmra.mrb[0].mxu0 %v1541
        %v1580 = vpop.f32.mrb[0].mxu0
        %v1581 = vadd.f32 0.0, %v1580
        %v1582 = vpop.f32.mrb[0].mxu0
        %v1583 = vpop.f32.mrb[0].mxu0
        %v1584 = vpop.f32.mrb[0].mxu0
        %1585 = vdwg.mxu0
        %v1586 = vcombine.low %v1443, %v1535
        %v1587 = vcombine.high %v1443, %v1535
        %v1589 = vunpack.c.l.s4 1983009808
        %v1590 = vunpack.c.0.s8 %v1589
        %v1591 = vlaneseq
        %v1592 = vshrl.u32 %v1591, 7
        %v1593 = vsub.s32 %v1590, %v1592
        %v1594 = vrot.slane %v1586, %v1593
        %v1596 = vunpack.c.l.s4 1983009808
        %v1597 = vunpack.c.0.s8 %v1596
        %v1598 = vlaneseq
        %v1599 = vshrl.u32 %v1598, 7
        %v1600 = vsub.s32 %v1597, %v1599
        %v1601 = vrot.slane %v1587, %v1600
        %v1602 = vcombine.low %v1489, %v1581
        %v1603 = vcombine.high %v1489, %v1581
        %v1605 = vunpack.c.l.s4 1983009808
        %v1606 = vunpack.c.0.s8 %v1605
        %v1607 = vlaneseq
        %v1608 = vshrl.u32 %v1607, 7
        %v1609 = vsub.s32 %v1606, %v1608
        %v1610 = vrot.slane %v1602, %v1609
        %v1612 = vunpack.c.l.s4 1983009808
        %v1613 = vunpack.c.0.s8 %v1612
        %v1614 = vlaneseq
        %v1615 = vshrl.u32 %v1614, 7
        %v1616 = vsub.s32 %v1613, %v1615
        %v1617 = vrot.slane %v1603, %v1616
        %v1618 = vcombine.low %v1594, %v1610
        %v1619 = vcombine.high %v1594, %v1610
        %v1621 = vunpack.c.l.s4 1934713408
        %v1622 = vunpack.c.0.s8 %v1621
        %v1623 = vlaneseq
        %v1624 = vshrl.u32 %v1623, 7
        %v1625 = vsub.s32 %v1622, %v1624
        %v1626 = vrot.slane %v1618, %v1625
        %v1628 = vunpack.c.l.s4 1934713408
        %v1629 = vunpack.c.0.s8 %v1628
        %v1630 = vlaneseq
        %v1631 = vshrl.u32 %v1630, 7
        %v1632 = vsub.s32 %v1629, %v1631
        %v1633 = vrot.slane %v1619, %v1632
        %v1634 = vcombine.low %v1601, %v1617
        %v1635 = vcombine.high %v1601, %v1617
        %v1637 = vunpack.c.l.s4 1934713408
        %v1638 = vunpack.c.0.s8 %v1637
        %v1639 = vlaneseq
        %v1640 = vshrl.u32 %v1639, 7
        %v1641 = vsub.s32 %v1638, %v1640
        %v1642 = vrot.slane %v1634, %v1641
        %v1644 = vunpack.c.l.s4 1934713408
        %v1645 = vunpack.c.0.s8 %v1644
        %v1646 = vlaneseq
        %v1647 = vshrl.u32 %v1646, 7
        %v1648 = vsub.s32 %v1645, %v1647
        %v1649 = vrot.slane %v1635, %v1648
        %v1650 = vcombine.high %v1626, 0.0
        %v1651 = vcombine.high %v1633, 0.0
        %v1652 = vcombine.high %v1642, 0.0
        %v1653 = vcombine.high %v1649, 0.0
        %v1654 = vcombine.low %v1626, %v1633
        %v1656 = vunpack.c.l.s4 1983009808
        %v1657 = vunpack.c.0.s8 %v1656
        %v1658 = vlaneseq
        %v1659 = vshrl.u32 %v1658, 7
        %v1660 = vsub.s32 %v1657, %v1659
        %v1661 = vrot.slane %v1654, %v1660
        %v1662 = vcombine.low %v1650, %v1651
        %v1664 = vunpack.c.l.s4 1983009808
        %v1665 = vunpack.c.0.s8 %v1664
        %v1666 = vlaneseq
        %v1667 = vshrl.u32 %v1666, 7
        %v1668 = vsub.s32 %v1665, %v1667
        %v1669 = vrot.slane %v1662, %v1668
        %v1670 = vcombine.low %v1642, %v1649
        %v1672 = vunpack.c.l.s4 1983009808
        %v1673 = vunpack.c.0.s8 %v1672
        %v1674 = vlaneseq
        %v1675 = vshrl.u32 %v1674, 7
        %v1676 = vsub.s32 %v1673, %v1675
        %v1677 = vrot.slane %v1670, %v1676
        %v1678 = vcombine.low %v1652, %v1653
        %v1680 = vunpack.c.l.s4 1983009808
        %v1681 = vunpack.c.0.s8 %v1680
        %v1682 = vlaneseq
        %v1683 = vshrl.u32 %v1682, 7
        %v1684 = vsub.s32 %v1681, %v1683
        %v1685 = vrot.slane %v1678, %v1684
        %v1686 = vcombine.low %v1661, %v1669
        %v1687 = vcombine.high %v1661, %v1669
        %v1689 = vunpack.c.l.s4 1934713408
        %v1690 = vunpack.c.0.s8 %v1689
        %v1691 = vlaneseq
        %v1692 = vshrl.u32 %v1691, 7
        %v1693 = vsub.s32 %v1690, %v1692
        %v1694 = vrot.slane %v1686, %v1693
        %v1696 = vunpack.c.l.s4 1934713408
        %v1697 = vunpack.c.0.s8 %v1696
        %v1698 = vlaneseq
        %v1699 = vshrl.u32 %v1698, 7
        %v1700 = vsub.s32 %v1697, %v1699
        %v1701 = vrot.slane %v1687, %v1700
        %v1702 = vcombine.low %v1677, %v1685
        %v1703 = vcombine.high %v1677, %v1685
        %v1705 = vunpack.c.l.s4 1934713408
        %v1706 = vunpack.c.0.s8 %v1705
        %v1707 = vlaneseq
        %v1708 = vshrl.u32 %v1707, 7
        %v1709 = vsub.s32 %v1706, %v1708
        %v1710 = vrot.slane %v1702, %v1709
        %v1712 = vunpack.c.l.s4 1934713408
        %v1713 = vunpack.c.0.s8 %v1712
        %v1714 = vlaneseq
        %v1715 = vshrl.u32 %v1714, 7
        %v1716 = vsub.s32 %v1713, %v1715
        %v1717 = vrot.slane %v1703, %v1716
        %v1718 = vcombine.low %v1694, %v1710
        %v1719 = vcombine.high %v1694, %v1710
        %v1720 = vcombine.low %v1701, %v1717
        %v1721 = vcombine.high %v1701, %v1717
        %1723 = vrot.lane.b32.xlu0 %v1719, 8
        %v1724 = vpop.permute.xlu0 %1723
        %1727 = vrot.lane.b32.xlu0 %v1720, 16
        %v1728 = vpop.permute.xlu0 %1727
        %1731 = vrot.lane.b32.xlu0 %v1721, 24
        %v1732 = vpop.permute.xlu0 %1731
        %v1734 = vsel %vm1160, %v1718, %v1724
        %vm1735 = vcmask 130048
        %v1736 = vsel %vm1735, %v1734, %v1728
        %vm1737 = vcmask 195584
        %v1738 = vsel %vm1737, %v1736, %v1732
        %v1739 = vpack.c.bf16 %v1738, %v1738
        %v1740 = vld [vmem:[%s6] sm:$0xf]
        %v1741 = vld [vmem:[%s6 + $0x4] sm:$0xf]
        %v1742 = vld [vmem:[%s6 + $0x8] sm:$0xf]
        %v1743 = vld [vmem:[%s6 + $0xc] sm:$0xf]
        %v1744 = vld [vmem:[#allocation2] sm:$0x1]
        %v1746 = vlaneseq
        %v1747 = vshrl.u32 %v1746, 7
        %v1748 = vsub.s32 0, %v1747
        %v1749 = vrot.slane %v1744, %v1748
        %v1755 = vunpack.c.l.b16 %v1740
        %v1756 = vunpack.c.l.b16 %v1741
        %v1757 = vunpack.c.l.b16 %v1742
        %v1758 = vunpack.c.l.b16 %v1743
        %v1759 = vpack.c.b16 %v1756, %v1755
        %v1760 = vpack.c.b16 %v1758, %v1757
        %v1764 = vsel %vm548, %v1739, 0
        %1766 = vmatprep.subr.bf16.mxu0 0
        %1767 = vmatpush1.bf16.msra.mxu0 %v1759
        %1768 = vmatprep.subr.bf16.mxu0 0
        %1769 = vmatpush1.bf16.msra.mxu0 %v1760
        %1770 = vmatprep.subr.bf16.mxu0 0
        %1771 = vmatpush1.bf16.msra.mxu0 0
        %1772 = vmatprep.subr.bf16.mxu0 0
        %1773 = vmatpush1.bf16.msra.mxu0 0
        %1774 = vmatprep.subr.bf16.mxu0 0
        %1775 = vmatpush1.bf16.msra.mxu0 0
        %1776 = vmatprep.subr.bf16.mxu0 0
        %1777 = vmatpush1.bf16.msra.mxu0 0
        %1778 = vmatprep.subr.bf16.mxu0 0
        %1779 = vmatpush1.bf16.msra.mxu0 0
        %1780 = vmatprep.subr.bf16.mxu0 0
        %1781 = vmatpush1.bf16.msra.mxu0 0
        %1782 = vmatprep.subr.bf16.mxu0 0
        %1783 = vmatpush1.bf16.msra.mxu0 0
        %1784 = vmatprep.subr.bf16.mxu0 0
        %1785 = vmatpush1.bf16.msra.mxu0 0
        %1786 = vmatprep.subr.bf16.mxu0 0
        %1787 = vmatpush1.bf16.msra.mxu0 0
        %1788 = vmatprep.subr.bf16.mxu0 0
        %1789 = vmatpush1.bf16.msra.mxu0 0
        %1790 = vmatprep.subr.bf16.mxu0 0
        %1791 = vmatpush1.bf16.msra.mxu0 0
        %1792 = vmatprep.subr.bf16.mxu0 0
        %1793 = vmatpush1.bf16.msra.mxu0 0
        %1794 = vmatprep.subr.bf16.mxu0 0
        %1795 = vmatpush1.bf16.msra.mxu0 0
        %1796 = vmatprep.subr.bf16.mxu0 0
        %1797 = vmatpush1.bf16.msra.mxu0 0
        %1798 = vmatprep.mubr.bf16.mxu0 0
        %1799 = vmatmul.mubr.bf16.gmra.mrb[0].mxu0 %v1764
        %v1800 = vpop.f32.mrb[0].mxu0
        %v1801 = vadd.f32 %v1749, %v1800
        %v1802 = vpop.f32.mrb[0].mxu0
        %v1803 = vpop.f32.mrb[0].mxu0
        %v1804 = vpop.f32.mrb[0].mxu0
        %1805 = vdwg.mxu0
        %v1806 = vadd.f32 %v544, %v1801
        %v1807 = vld [vmem:[#allocation5] sm:$0x1]
        %v1808 = vld [vmem:[#allocation7] sm:$0x1]
        %v1809 = vsel %vm548, %v1806, 0.0
        %1810 = vadd.xlane.f32.xlu0 %v1809
        %v1811 = vpop.xlane.xlu0 %1810
        %v1812 = vmul.f32 %v1811, %v552
        %v1813 = vsub.f32 %v1806, %v1812
        %v1814 = vmul.f32 %v1813, %v1813
        %v1815 = vsel %vm548, %v1814, 0.0
        %1816 = vadd.xlane.f32.xlu0 %v1815
        %v1817 = vpop.xlane.xlu0 %1816
        %v1818 = vmul.f32 %v1817, %v552
        %v1819 = vadd.f32 %v1818, 1e-05
        %v1820 = vrsqrt.pop %v1819
        %v1821 = vmul.f32 %v1813, %v1820
        %v1823 = vlaneseq
        %v1824 = vshrl.u32 %v1823, 7
        %v1825 = vsub.s32 0, %v1824
        %v1826 = vrot.slane %v1807, %v1825
        %v1828 = vmul.f32 %v1821, %v1826
        %v1830 = vlaneseq
        %v1831 = vshrl.u32 %v1830, 7
        %v1832 = vsub.s32 0, %v1831
        %v1833 = vrot.slane %v1808, %v1832
        %v1835 = vadd.f32 %v1828, %v1833
        %v1836 = vpack.c.bf16 %v1835, %v1835
        %v1837 = vld [vmem:[%s10] sm:$0xf]
        %v1838 = vld [vmem:[%s10 + $0x4] sm:$0xf]
        %v1839 = vld [vmem:[%s10 + $0x8] sm:$0xf]
        %v1840 = vld [vmem:[%s10 + $0xc] sm:$0xf]
        %v1841 = vld [vmem:[%s11] sm:$0x1]
        %v1843 = vlaneseq
        %v1844 = vshrl.u32 %v1843, 7
        %v1845 = vsub.s32 0, %v1844
        %v1846 = vrot.slane %v1841, %v1845
        %v1852 = vunpack.c.l.b16 %v1837
        %v1853 = vunpack.c.l.b16 %v1838
        %v1854 = vunpack.c.l.b16 %v1839
        %v1855 = vunpack.c.l.b16 %v1840
        %v1856 = vpack.c.b16 %v1853, %v1852
        %v1857 = vpack.c.b16 %v1855, %v1854
        %v1861 = vsel %vm548, %v1836, 0
        %1863 = vmatprep.subr.bf16.mxu0 0
        %1864 = vmatpush1.bf16.msra.mxu0 %v1856
        %1865 = vmatprep.subr.bf16.mxu0 0
        %1866 = vmatpush1.bf16.msra.mxu0 %v1857
        %1867 = vmatprep.subr.bf16.mxu0 0
        %1868 = vmatpush1.bf16.msra.mxu0 0
        %1869 = vmatprep.subr.bf16.mxu0 0
        %1870 = vmatpush1.bf16.msra.mxu0 0
        %1871 = vmatprep.subr.bf16.mxu0 0
        %1872 = vmatpush1.bf16.msra.mxu0 0
        %1873 = vmatprep.subr.bf16.mxu0 0
        %1874 = vmatpush1.bf16.msra.mxu0 0
        %1875 = vmatprep.subr.bf16.mxu0 0
        %1876 = vmatpush1.bf16.msra.mxu0 0
        %1877 = vmatprep.subr.bf16.mxu0 0
        %1878 = vmatpush1.bf16.msra.mxu0 0
        %1879 = vmatprep.subr.bf16.mxu0 0
        %1880 = vmatpush1.bf16.msra.mxu0 0
        %1881 = vmatprep.subr.bf16.mxu0 0
        %1882 = vmatpush1.bf16.msra.mxu0 0
        %1883 = vmatprep.subr.bf16.mxu0 0
        %1884 = vmatpush1.bf16.msra.mxu0 0
        %1885 = vmatprep.subr.bf16.mxu0 0
        %1886 = vmatpush1.bf16.msra.mxu0 0
        %1887 = vmatprep.subr.bf16.mxu0 0
        %1888 = vmatpush1.bf16.msra.mxu0 0
        %1889 = vmatprep.subr.bf16.mxu0 0
        %1890 = vmatpush1.bf16.msra.mxu0 0
        %1891 = vmatprep.subr.bf16.mxu0 0
        %1892 = vmatpush1.bf16.msra.mxu0 0
        %1893 = vmatprep.subr.bf16.mxu0 0
        %1894 = vmatpush1.bf16.msra.mxu0 0
        %1895 = vmatprep.mubr.bf16.mxu0 0
        %1896 = vmatmul.mubr.bf16.gmra.mrb[0].mxu0 %v1861
        %v1897 = vpop.f32.mrb[0].mxu0
        %v1898 = vadd.f32 %v1846, %v1897
        %v1899 = vpop.f32.mrb[0].mxu0
        %v1900 = vpop.f32.mrb[0].mxu0
        %v1901 = vpop.f32.mrb[0].mxu0
        %1902 = vdwg.mxu0
        %v1903 = vmax.f32 %v1898, 0.0
        %v1904 = vpack.c.bf16 %v1903, %v1903
        %v1905 = vld [vmem:[%s12] sm:$0xf]
        %v1906 = vld [vmem:[%s12 + $0x4] sm:$0xf]
        %v1907 = vld [vmem:[%s12 + $0x8] sm:$0xf]
        %v1908 = vld [vmem:[%s12 + $0xc] sm:$0xf]
        %v1909 = vld [vmem:[%s12 + $0x10] sm:$0xf]
        %v1910 = vld [vmem:[%s12 + $0x14] sm:$0xf]
        %v1911 = vld [vmem:[%s12 + $0x18] sm:$0xf]
        %v1912 = vld [vmem:[%s12 + $0x1c] sm:$0xf]
        %v1913 = vld [vmem:[%s12 + $0x20] sm:$0xf]
        %v1914 = vld [vmem:[%s12 + $0x24] sm:$0xf]
        %v1915 = vld [vmem:[%s12 + $0x28] sm:$0xf]
        %v1916 = vld [vmem:[%s12 + $0x2c] sm:$0xf]
        %v1917 = vld [vmem:[%s12 + $0x30] sm:$0xf]
        %v1918 = vld [vmem:[%s12 + $0x34] sm:$0xf]
        %v1919 = vld [vmem:[%s12 + $0x38] sm:$0xf]
        %v1920 = vld [vmem:[%s12 + $0x3c] sm:$0xf]
        %v1921 = vld [vmem:[%s13] sm:$0x1]
        %v1923 = vlaneseq
        %v1924 = vshrl.u32 %v1923, 7
        %v1925 = vsub.s32 0, %v1924
        %v1926 = vrot.slane %v1921, %v1925
        %v1944 = vunpack.c.l.b16 %v1905
        %v1945 = vunpack.c.l.b16 %v1906
        %v1946 = vunpack.c.l.b16 %v1907
        %v1947 = vunpack.c.l.b16 %v1908
        %v1948 = vunpack.c.l.b16 %v1909
        %v1949 = vunpack.c.l.b16 %v1910
        %v1950 = vunpack.c.l.b16 %v1911
        %v1951 = vunpack.c.l.b16 %v1912
        %v1952 = vunpack.c.l.b16 %v1913
        %v1953 = vunpack.c.l.b16 %v1914
        %v1954 = vunpack.c.l.b16 %v1915
        %v1955 = vunpack.c.l.b16 %v1916
        %v1956 = vunpack.c.l.b16 %v1917
        %v1957 = vunpack.c.l.b16 %v1918
        %v1958 = vunpack.c.l.b16 %v1919
        %v1959 = vunpack.c.l.b16 %v1920
        %v1960 = vpack.c.b16 %v1945, %v1944
        %v1961 = vpack.c.b16 %v1947, %v1946
        %v1962 = vpack.c.b16 %v1949, %v1948
        %v1963 = vpack.c.b16 %v1951, %v1950
        %v1964 = vpack.c.b16 %v1953, %v1952
        %v1965 = vpack.c.b16 %v1955, %v1954
        %v1966 = vpack.c.b16 %v1957, %v1956
        %v1967 = vpack.c.b16 %v1959, %v1958
        %1976 = vmatprep.subr.bf16.mxu0 0
        %1977 = vmatpush1.bf16.msra.mxu0 %v1960
        %1978 = vmatprep.subr.bf16.mxu0 0
        %1979 = vmatpush1.bf16.msra.mxu0 %v1961
        %1980 = vmatprep.subr.bf16.mxu0 0
        %1981 = vmatpush1.bf16.msra.mxu0 %v1962
        %1982 = vmatprep.subr.bf16.mxu0 0
        %1983 = vmatpush1.bf16.msra.mxu0 %v1963
        %1984 = vmatprep.subr.bf16.mxu0 0
        %1985 = vmatpush1.bf16.msra.mxu0 %v1964
        %1986 = vmatprep.subr.bf16.mxu0 0
        %1987 = vmatpush1.bf16.msra.mxu0 %v1965
        %1988 = vmatprep.subr.bf16.mxu0 0
        %1989 = vmatpush1.bf16.msra.mxu0 %v1966
        %1990 = vmatprep.subr.bf16.mxu0 0
        %1991 = vmatpush1.bf16.msra.mxu0 %v1967
        %1992 = vmatprep.subr.bf16.mxu0 0
        %1993 = vmatpush1.bf16.msra.mxu0 0
        %1994 = vmatprep.subr.bf16.mxu0 0
        %1995 = vmatpush1.bf16.msra.mxu0 0
        %1996 = vmatprep.subr.bf16.mxu0 0
        %1997 = vmatpush1.bf16.msra.mxu0 0
        %1998 = vmatprep.subr.bf16.mxu0 0
        %1999 = vmatpush1.bf16.msra.mxu0 0
        %2000 = vmatprep.subr.bf16.mxu0 0
        %2001 = vmatpush1.bf16.msra.mxu0 0
        %2002 = vmatprep.subr.bf16.mxu0 0
        %2003 = vmatpush1.bf16.msra.mxu0 0
        %2004 = vmatprep.subr.bf16.mxu0 0
        %2005 = vmatpush1.bf16.msra.mxu0 0
        %2006 = vmatprep.subr.bf16.mxu0 0
        %2007 = vmatpush1.bf16.msra.mxu0 0
        %2008 = vmatprep.mubr.bf16.mxu0 0
        %2009 = vmatmul.mubr.bf16.gmra.mrb[0].mxu0 %v1904
        %v2010 = vpop.f32.mrb[0].mxu0
        %v2011 = vadd.f32 %v1926, %v2010
        %v2012 = vpop.f32.mrb[0].mxu0
        %v2013 = vpop.f32.mrb[0].mxu0
        %v2014 = vpop.f32.mrb[0].mxu0
        %2015 = vdwg.mxu0
        %v2016 = vadd.f32 %v1806, %v2011
        %2017 = vst.msk [vmem:[%s531] sm:$0xff] %vm548, %v2016
        %s2018 = sand.u32 %s358, 1
        %s2019 = scalar_lea.sflag [#allocation4], %s2018
        %s2020 = sand.u32 %s358, 1
        %s2021 = smul.addr %s2020, 8
        %s2022 = scalar_lea.vmem [#allocation8], %s2021
        // Predicated region
        $region89: #{tpu_custom_call.1} parent=75 // pred_check
          %p2023 = pneg %p368
        $region90: #{tpu_custom_call.1} parent=75 // pred_check_branch
          %2025 = sbr.rel (%p2023) target = $region92
        $region91: #{tpu_custom_call.1} parent=75 // pred_region
          %s2027 = ssub.s32 128, 128
          %2028 = vsyncadd %s2019, %s2027
          %s2029 = sadd.s32 %s35, %s34
          %s2030 = smul.addr %s2029, 128
          %s2031 = scalar_lea.hbm %s14, %s2030
          %s2033 = sshll.u32 %s2022, 4
          %s2034 = int_to_ptr.vmem [resolvable:$true] %s2033
          %2036 = dma.vmem_to_hbm [thread:$0]  %s2034, 128, %s2031, %s2019
        $region92: #{tpu_custom_call.1} parent=75 // pred_fallthru
          _
      $region76: #{tpu_custom_call.1} parent=5 // pred_fallthru
        _
      %p2037 = scmp.le.s32.totalorder 2, %s25
      // Predicated region
      $region93: #{tpu_custom_call.1} parent=5 // pred_check
        %p2038 = pneg %p2037
      $region94: #{tpu_custom_call.1} parent=5 // pred_check_branch
        %2040 = sbr.rel (%p2038) target = $region96
      $region95: #{tpu_custom_call.1} parent=5 // pred_region
        %s2041 = ssub.s32 %s25, 2
        // Predicated region
        $region97: #{tpu_custom_call.1} parent=95 // pred_check
          %p2042 = pneg %p374
        $region98: #{tpu_custom_call.1} parent=95 // pred_check_branch
          %2044 = sbr.rel (%p2042) target = $region100
        $region99: #{tpu_custom_call.1} parent=95 // pred_region
          %s2045 = sand.u32 %s359, 1
          %s2046 = scalar_lea.sflag [#allocation4], %s2045
          %s2047 = sand.u32 %s359, 1
          %s2048 = smul.addr %s2047, 8
          %s2049 = scalar_lea.vmem [#allocation8], %s2048
          %2050 = dma.done %s2046, 128
        $region100: #{tpu_custom_call.1} parent=95 // pred_fallthru
          _
      $region96: #{tpu_custom_call.1} parent=5 // pred_fallthru
        _
    $region6: #{tpu_custom_call.1} parent=1 // loop_footer
      %s29 = sadd.s32 1, %s25
    $region7: #{tpu_custom_call.1} parent=1 // loop_footer_branch
      %24 = sbr.rel target = $region3
    $region8: #{tpu_custom_call.1} parent=1 // loop_exit
      _
    %2051 = vsyncpa [#allocation3], 1
    %s2052 = scalar_lea.sflag [#allocation3], 1
    %2053 = vsyncpa %s2052, 1
    %2054 = vsyncpa [#allocation6], 1
    %2055 = vsyncpa [#allocation4], 1
    %s2056 = scalar_lea.sflag [#allocation4], 1
    %2057 = vsyncpa %s2056, 1

</llo_original>
